<compile_context>
chip_gen: v6e
topology: v6e:2x2x1
jax: 0.10.0
libtpu: 0.0.40
codegen_flags: <defaults>
</compile_context>

<pallas_src>
import jax
import jax.numpy as jnp
from jax.experimental import pallas as pl
from jax.experimental.pallas import tpu as pltpu


# ----------------------------- Pallas kernels ------------------------------

def _encoder_kernel(emb_ref, w_ref, b_ref, we_ref, ab_ref,
                    enc_out_ref, enc_proj_ref, hN_ref, cN_ref,
                    h_sc, c_sc):
    """One grid step = one encoder timestep.  h/c persist in VMEM scratch."""
    t = pl.program_id(0)
    Hp = h_sc.shape[1]

    @pl.when(t == 0)
    def _():
        h_sc[...] = jnp.zeros_like(h_sc)
        c_sc[...] = jnp.zeros_like(c_sc)

    x = emb_ref[0]                                       # (B, Ep)
    xh = jnp.concatenate([x, h_sc[...]], axis=1)         # (B, Ep + Hp), lane-aligned
    gates = jnp.dot(xh, w_ref[...],
                    preferred_element_type=jnp.float32) + b_ref[...]
    # PyTorch LSTM gate order: i, f, g, o (each padded H -> Hp; padded cols are 0)
    i = jax.nn.sigmoid(gates[:, 0 * Hp:1 * Hp])
    f = jax.nn.sigmoid(gates[:, 1 * Hp:2 * Hp])
    g = jnp.tanh(gates[:, 2 * Hp:3 * Hp])
    o = jax.nn.sigmoid(gates[:, 3 * Hp:4 * Hp])
    c_new = f * c_sc[...] + i * g
    h_new = o * jnp.tanh(c_new)

    h_sc[...] = h_new
    c_sc[...] = c_new

    enc_out_ref[0] = h_new                 # streamed per-step encoder output
    # Decode-step-invariant half of the attention energy, computed ONCE here
    # (instead of every decoder step): enc_proj_t = h_t @ We + b.
    enc_proj_ref[0] = jnp.dot(h_new, we_ref[...],
                              preferred_element_type=jnp.float32) + ab_ref[...]
    hN_ref[...] = h_new                    # constant block: final flush = last step
    cN_ref[...] = c_new


def _decoder_kernel(emb_ref, enc_ref, ep_ref, h0_ref, c0_ref,
                    wh_ref, v_ref, w_ref, b_ref, ow_ref, ob_ref,
                    pred_ref, attn_ref,
                    h_sc, c_sc):
    """One grid step = one decode step: attention + LSTM cell + projection."""
    t = pl.program_id(0)
    Hp = h_sc.shape[1]

    @pl.when(t == 0)
    def _():
        h_sc[...] = h0_ref[...]
        c_sc[...] = c0_ref[...]

    h = h_sc[...]                                        # (B, Hp) pre-step hidden

    # ---- attention: tanh(Wh h + (We enc + b)) . v, softmax over T_src ----
    h_proj = jnp.dot(h, wh_ref[...], preferred_element_type=jnp.float32)  # (B, Hp)
    energy = jnp.tanh(h_proj[:, None, :] + ep_ref[...])                   # (B, T, Hp)
    # Tiny score reduction stays off the MXU critical path (lane reduce).
    scores = jnp.sum(energy * v_ref[...][None], axis=-1)                  # (B, T)
    m = jnp.max(scores, axis=1, keepdims=True)
    e = jnp.exp(scores - m)
    # Exact division (B,1): keeps softmax rows summing to 1 to fp32 precision.
    attn = e / jnp.sum(e, axis=1, keepdims=True)
    attn_ref[0] = attn
    # attn_applied = bmm(attn.unsqueeze(1), encoder_outputs)  -> weighted sum
    ctx = jnp.sum(attn[:, :, None] * enc_ref[...], axis=1)                # (B, Hp)

    # ---- LSTM cell: single fused matmul over concat([emb, ctx, h]) ----
    x = emb_ref[0]                                                        # (B, Ep)
    xh = jnp.concatenate([x, ctx, h], axis=1)                             # (B, Ep + 2Hp)
    gates = jnp.dot(xh, w_ref[...],
                    preferred_element_type=jnp.float32) + b_ref[...]
    i = jax.nn.sigmoid(gates[:, 0 * Hp:1 * Hp])
    f = jax.nn.sigmoid(gates[:, 1 * Hp:2 * Hp])
    g = jnp.tanh(gates[:, 2 * Hp:3 * Hp])
    o = jax.nn.sigmoid(gates[:, 3 * Hp:4 * Hp])
    c_new = f * c_sc[...] + i * g
    h_new = o * jnp.tanh(c_new)
    h_sc[...] = h_new
    c_sc[...] = c_new

    # ---- output projection ----
    pred_ref[0] = jnp.dot(h_new, ow_ref[...],
                          preferred_element_type=jnp.float32) + ob_ref[...]


# ----------------------------- parameter init -------------------------------

def _pad_to(x, shape):
    out = jnp.zeros(shape, x.dtype)
    return out.at[tuple(slice(0, s) for s in x.shape)].set(x)


def _pad_gate_cols(w, H, Hp):
    """(In, 4H) -> (In, 4Hp): pad each PyTorch gate block (i,f,g,o) to Hp cols."""
    blocks = [_pad_to(w[:, g * H:(g + 1) * H], (w.shape[0], Hp)) for g in range(4)]
    return jnp.concatenate(blocks, axis=1)


def init_params(key, V_in, V_out, E, H, Ep, Hp, Vp):
    ks = jax.random.split(key, 14)
    s = 0.1
    rnd = lambda k, shape: jax.random.normal(k, shape, dtype=jnp.float32) * s

    # logical (PyTorch-shaped, pre-transposed to (in, out)) parameters
    enc_emb = rnd(ks[0], (V_in, E)).at[0].set(0.0)       # padding_idx=0
    dec_emb = rnd(ks[1], (V_out, E)).at[0].set(0.0)      # padding_idx=0
    enc_wih = rnd(ks[2], (E, 4 * H))
    enc_whh = rnd(ks[3], (H, 4 * H))
    enc_b   = rnd(ks[4], (1, 4 * H))
    attn_wh = rnd(ks[5], (H, H))      # hidden half of Linear(2H, H)
    attn_we = rnd(ks[6], (H, H))      # encoder-output half of Linear(2H, H)
    attn_b  = rnd(ks[7], (1, H))
    attn_v  = jax.random.uniform(ks[8], (1, H), dtype=jnp.float32)  # torch.rand(hidden)
    dec_wih = rnd(ks[9], (E + H, 4 * H))
    dec_whh = rnd(ks[10], (H, 4 * H))
    dec_b   = rnd(ks[11], (1, 4 * H))
    out_w   = rnd(ks[12], (H, V_out))
    out_b   = rnd(ks[13], (1, V_out))

    # Padded, lane-dense kernel layout.  Padded rows/cols are zero so padded
    # h/c lanes stay exactly zero through the recurrence (identical math).
    enc_w = jnp.concatenate(
        [_pad_to(_pad_gate_cols(enc_wih, H, Hp), (Ep, 4 * Hp)),     # x part
         _pad_to(_pad_gate_cols(enc_whh, H, Hp), (Hp, 4 * Hp))],    # h part
        axis=0)
    dec_w = jnp.concatenate(
        [_pad_to(_pad_gate_cols(dec_wih[:E], H, Hp), (Ep, 4 * Hp)),   # emb part
         _pad_to(_pad_gate_cols(dec_wih[E:], H, Hp), (Hp, 4 * Hp)),   # ctx part
         _pad_to(_pad_gate_cols(dec_whh, H, Hp), (Hp, 4 * Hp))],      # h part
        axis=0)

    return dict(
        enc_emb=_pad_to(enc_emb, (V_in, Ep)),
        dec_emb=_pad_to(dec_emb, (V_out, Ep)),
        enc_w=enc_w,
        enc_b=_pad_gate_cols(enc_b, H, Hp),
        attn_wh=_pad_to(attn_wh, (Hp, Hp)),
        attn_we=_pad_to(attn_we, (Hp, Hp)),
        attn_b=_pad_to(attn_b, (1, Hp)),
        attn_v=_pad_to(attn_v, (1, Hp)),
        dec_w=dec_w,
        dec_b=_pad_gate_cols(dec_b, H, Hp),
        out_w=_pad_to(out_w, (Hp, Vp)),
        out_b=_pad_to(out_b, (1, Vp)),
    )


# ----------------------------- model wrapper -------------------------------

def transliteration_forward(params, source, target):
    """source: (B, T_src) int32, target: (B, T_tgt) int32.

    Returns (predictions (B, T_tgt, V_out), attentions (B, T_tgt, T_src)),
    matching the PyTorch forward (slot t=0 stays zero, teacher forcing on).
    """
    B, T_src = source.shape
    _, T_tgt = target.shape
    T_dec = T_tgt - 1
    Ep = params["enc_emb"].shape[1]
    Hp = params["attn_wh"].shape[0]
    Vp = params["out_w"].shape[1]
    V_out = params["dec_emb"].shape[0]

    # ----- encoder: one fused pallas_call over T_src -----
    emb_src = jnp.take(params["enc_emb"], source.T, axis=0)     # (T_src, B, Ep)
    enc_out_tm, enc_proj_tm, h_enc, c_enc = pl.pallas_call(
        _encoder_kernel,
        out_shape=(jax.ShapeDtypeStruct((T_src, B, Hp), jnp.float32),
                   jax.ShapeDtypeStruct((T_src, B, Hp), jnp.float32),
                   jax.ShapeDtypeStruct((B, Hp), jnp.float32),
                   jax.ShapeDtypeStruct((B, Hp), jnp.float32)),
        grid=(T_src,),
        in_specs=[pl.BlockSpec((1, B, Ep), lambda t: (t, 0, 0)),
                  pl.BlockSpec((Ep + Hp, 4 * Hp), lambda t: (0, 0)),
                  pl.BlockSpec((1, 4 * Hp), lambda t: (0, 0)),
                  pl.BlockSpec((Hp, Hp), lambda t: (0, 0)),
                  pl.BlockSpec((1, Hp), lambda t: (0, 0))],
        out_specs=(pl.BlockSpec((1, B, Hp), lambda t: (t, 0, 0)),
                   pl.BlockSpec((1, B, Hp), lambda t: (t, 0, 0)),
                   pl.BlockSpec((B, Hp), lambda t: (0, 0)),
                   pl.BlockSpec((B, Hp), lambda t: (0, 0))),
        scratch_shapes=[pltpu.VMEM((B, Hp), jnp.float32),
                        pltpu.VMEM((B, Hp), jnp.float32)],
        compiler_params=pltpu.CompilerParams(
            dimension_semantics=("arbitrary",)),
    )(emb_src, params["enc_w"], params["enc_b"],
      params["attn_we"], params["attn_b"])

    encoder_outputs = jnp.transpose(enc_out_tm, (1, 0, 2))      # (B, T_src, Hp)
    enc_proj = jnp.transpose(enc_proj_tm, (1, 0, 2))            # (B, T_src, Hp)

    # 1-layer unidirectional LSTM -> decoder hidden = encoder final (h, c).
    # Teacher forcing (prob=1.0): decoder inputs are target[:, :-1], known upfront.
    dec_in = jnp.take(params["dec_emb"], target[:, :T_dec].T, axis=0)  # (T_dec, B, Ep)

    preds_tm, attns_tm = pl.pallas_call(
        _decoder_kernel,
        out_shape=(jax.ShapeDtypeStruct((T_dec, B, Vp), jnp.float32),
                   jax.ShapeDtypeStruct((T_dec, B, T_src), jnp.float32)),
        grid=(T_dec,),
        in_specs=[pl.BlockSpec((1, B, Ep), lambda t: (t, 0, 0)),      # dec embeddings
                  pl.BlockSpec((B, T_src, Hp), lambda t: (0, 0, 0)),  # encoder outputs
                  pl.BlockSpec((B, T_src, Hp), lambda t: (0, 0, 0)),  # hoisted enc proj
                  pl.BlockSpec((B, Hp), lambda t: (0, 0)),            # h0
                  pl.BlockSpec((B, Hp), lambda t: (0, 0)),            # c0
                  pl.BlockSpec((Hp, Hp), lambda t: (0, 0)),           # attn_wh
                  pl.BlockSpec((1, Hp), lambda t: (0, 0)),            # attn_v
                  pl.BlockSpec((Ep + 2 * Hp, 4 * Hp), lambda t: (0, 0)),  # dec_w
                  pl.BlockSpec((1, 4 * Hp), lambda t: (0, 0)),        # dec_b
                  pl.BlockSpec((Hp, Vp), lambda t: (0, 0)),           # out_w
                  pl.BlockSpec((1, Vp), lambda t: (0, 0))],           # out_b
        out_specs=(pl.BlockSpec((1, B, Vp), lambda t: (t, 0, 0)),
                   pl.BlockSpec((1, B, T_src), lambda t: (t, 0, 0))),
        scratch_shapes=[pltpu.VMEM((B, Hp), jnp.float32),             # h carry
                        pltpu.VMEM((B, Hp), jnp.float32)],            # c carry
        compiler_params=pltpu.CompilerParams(
            dimension_semantics=("arbitrary",)),
    )(dec_in, encoder_outputs, enc_proj, h_enc, c_enc,
      params["attn_wh"], params["attn_v"],
      params["dec_w"], params["dec_b"], params["out_w"], params["out_b"])

    preds_body = jnp.transpose(preds_tm, (1, 0, 2))[:, :, :V_out]     # (B, T_dec, V_out)
    attns_body = jnp.transpose(attns_tm, (1, 0, 2))                   # (B, T_dec, T_src)
    predictions = jnp.concatenate(
        [jnp.zeros((B, 1, V_out), jnp.float32), preds_body], axis=1)  # slot 0 stays zero
    attentions = jnp.concatenate(
        [jnp.zeros((B, 1, T_src), jnp.float32), attns_body], axis=1)
    return predictions, attentions


# --------------------------------- main -------------------------------------

if __name__ == "__main__":
    key = jax.random.PRNGKey(0)
    B, T_src, T_tgt = 2, 8, 8
    V_in, V_out = 20, 24
    E, H = 16, 32
    Ep, Hp, Vp = 128, 128, 128      # lane-dense padded sizes

    k_par, k_src, k_tgt = jax.random.split(key, 3)
    params = init_params(k_par, V_in, V_out, E, H, Ep, Hp, Vp)
    source = jax.random.randint(k_src, (B, T_src), 1, V_in, dtype=jnp.int32)
    target = jax.random.randint(k_tgt, (B, T_tgt), 1, V_out, dtype=jnp.int32)

    fwd = jax.jit(transliteration_forward)
    preds, attns = fwd(params, source, target)
    preds, attns = jax.block_until_ready((preds, attns))

    assert preds.shape == (B, T_tgt, V_out), preds.shape
    assert attns.shape == (B, T_tgt, T_src), attns.shape
    assert bool(jnp.all(jnp.isfinite(preds))), "non-finite predictions"
    assert bool(jnp.all(jnp.isfinite(attns))), "non-finite attentions"
    # attention rows (for t >= 1) must sum to 1 (exact softmax division)
    row_sums = jnp.sum(attns[:, 1:], axis=-1)
    assert bool(jnp.allclose(row_sums, 1.0, atol=1e-3)), row_sums
    assert bool(jnp.all(preds[:, 0] == 0.0)) and bool(jnp.all(attns[:, 0] == 0.0))

    print("KERNEL_OK")
</pallas_src>

<mosaic_0001>
module attributes {stable_mosaic.version = 11 : i64} {
  func.func @_encoder_kernel(%arg0: i32, %arg1: memref<1x2x128xf32, #tpu.memory_space<vmem>>, %arg2: memref<256x512xf32, #tpu.memory_space<vmem>>, %arg3: memref<1x512xf32, #tpu.memory_space<vmem>>, %arg4: memref<128x128xf32, #tpu.memory_space<vmem>>, %arg5: memref<1x128xf32, #tpu.memory_space<vmem>>, %arg6: memref<1x2x128xf32, #tpu.memory_space<vmem>>, %arg7: memref<1x2x128xf32, #tpu.memory_space<vmem>>, %arg8: memref<2x128xf32, #tpu.memory_space<vmem>>, %arg9: memref<2x128xf32, #tpu.memory_space<vmem>>, %arg10: memref<2x128xf32, #tpu.memory_space<vmem>>, %arg11: memref<2x128xf32, #tpu.memory_space<vmem>>) attributes {dimension_semantics = [#tpu.dimension_semantics<arbitrary>], iteration_bounds = array<i64: 8>, scalar_prefetch = 0 : i64, scratch_operands = 2 : i64, tpu.core_type = #tpu.core_type<tc>, window_params = [{transform_indices = @transform_0, window_bounds = array<i64: 1, 2, 128>}, {pipeline_mode = #tpu.pipeline_mode<synchronous>, transform_indices = @transform_1, window_bounds = array<i64: 256, 512>}, {pipeline_mode = #tpu.pipeline_mode<synchronous>, transform_indices = @transform_2, window_bounds = array<i64: 1, 512>}, {pipeline_mode = #tpu.pipeline_mode<synchronous>, transform_indices = @transform_3, window_bounds = array<i64: 128, 128>}, {pipeline_mode = #tpu.pipeline_mode<synchronous>, transform_indices = @transform_4, window_bounds = array<i64: 1, 128>}, {transform_indices = @transform_5, window_bounds = array<i64: 1, 2, 128>}, {transform_indices = @transform_6, window_bounds = array<i64: 1, 2, 128>}, {pipeline_mode = #tpu.pipeline_mode<synchronous>, transform_indices = @transform_7, window_bounds = array<i64: 2, 128>}, {pipeline_mode = #tpu.pipeline_mode<synchronous>, transform_indices = @transform_8, window_bounds = array<i64: 2, 128>}]} {
    %c0_i32 = arith.constant 0 : i32
    %0 = arith.cmpi eq, %arg0, %c0_i32 : i32
    %1 = arith.extui %0 : i1 to i32
    %c0_i32_0 = arith.constant 0 : i32
    %2 = arith.cmpi ne, %1, %c0_i32_0 : i32
    scf.if %2 {
      %cst_33 = arith.constant 0.000000e+00 : f32
      %53 = vector.broadcast %cst_33 : f32 to vector<2x128xf32>
      %c0_34 = arith.constant 0 : index
      %c0_35 = arith.constant 0 : index
      %54 = vector.load %arg10[%c0_34, %c0_35] : memref<2x128xf32, #tpu.memory_space<vmem>>, vector<2x128xf32>
      tpu.vector_store %arg10[%c0_34, %c0_35], %53 {strides = array<i32>} : memref<2x128xf32, #tpu.memory_space<vmem>>, vector<2x128xf32>,
      %cst_36 = arith.constant 0.000000e+00 : f32
      %55 = vector.broadcast %cst_36 : f32 to vector<2x128xf32>
      %c0_37 = arith.constant 0 : index
      %c0_38 = arith.constant 0 : index
      %56 = vector.load %arg11[%c0_37, %c0_38] : memref<2x128xf32, #tpu.memory_space<vmem>>, vector<2x128xf32>
      tpu.vector_store %arg11[%c0_37, %c0_38], %55 {strides = array<i32>} : memref<2x128xf32, #tpu.memory_space<vmem>>, vector<2x128xf32>,
    } else {
    }
    %c0 = arith.constant 0 : index
    %c0_1 = arith.constant 0 : index
    %c0_2 = arith.constant 0 : index
    %3 = vector.load %arg1[%c0, %c0_1, %c0_2] : memref<1x2x128xf32, #tpu.memory_space<vmem>>, vector<1x2x128xf32>
    %4 = vector.shape_cast %3 : vector<1x2x128xf32> to vector<2x128xf32>
    %c0_3 = arith.constant 0 : index
    %c0_4 = arith.constant 0 : index
    %5 = vector.load %arg10[%c0_3, %c0_4] : memref<2x128xf32, #tpu.memory_space<vmem>>, vector<2x128xf32>
    %6 = tpu.concatenate %4, %5 in 1 : vector<2x128xf32>, vector<2x128xf32> -> vector<2x256xf32>
    %c0_5 = arith.constant 0 : index
    %c0_6 = arith.constant 0 : index
    %7 = vector.load %arg2[%c0_5, %c0_6] : memref<256x512xf32, #tpu.memory_space<vmem>>, vector<256x512xf32>
    %cst = arith.constant dense<0.000000e+00> : vector<2x512xf32>
    %8 = tpu.matmul %6, %7, %cst {dimension_numbers = #tpu.dot_dimension_numbers<[1], [0], [0], [1], [0, 0, 1, 1], [], []>} : vector<2x256xf32>, vector<256x512xf32>, vector<2x512xf32> -> vector<2x512xf32>
    %c0_7 = arith.constant 0 : index
    %c0_8 = arith.constant 0 : index
    %9 = vector.load %arg3[%c0_7, %c0_8] : memref<1x512xf32, #tpu.memory_space<vmem>>, vector<1x512xf32>
    %10 = vector.broadcast %9 : vector<1x512xf32> to vector<2x512xf32>
    %11 = arith.addf %8, %10 : vector<2x512xf32>
    %12 = vector.extract_strided_slice %11 {offsets = [0, 0], sizes = [2, 128], strides = [1, 1]} : vector<2x512xf32> to vector<2x128xf32>
    %13 = arith.negf %12 : vector<2x128xf32>
    %14 = math.exp %13 : vector<2x128xf32>
    %cst_9 = arith.constant 1.000000e+00 : f32
    %15 = vector.broadcast %cst_9 : f32 to vector<2x128xf32>
    %16 = arith.addf %15, %14 : vector<2x128xf32>
    %17 = arith.divf %15, %16 : vector<2x128xf32>
    %18 = vector.extract_strided_slice %11 {offsets = [0, 128], sizes = [2, 128], strides = [1, 1]} : vector<2x512xf32> to vector<2x128xf32>
    %19 = arith.negf %18 : vector<2x128xf32>
    %20 = math.exp %19 : vector<2x128xf32>
    %cst_10 = arith.constant 1.000000e+00 : f32
    %21 = vector.broadcast %cst_10 : f32 to vector<2x128xf32>
    %22 = arith.addf %21, %20 : vector<2x128xf32>
    %23 = arith.divf %21, %22 : vector<2x128xf32>
    %24 = vector.extract_strided_slice %11 {offsets = [0, 256], sizes = [2, 128], strides = [1, 1]} : vector<2x512xf32> to vector<2x128xf32>
    %25 = math.tanh %24 : vector<2x128xf32>
    %26 = vector.extract_strided_slice %11 {offsets = [0, 384], sizes = [2, 128], strides = [1, 1]} : vector<2x512xf32> to vector<2x128xf32>
    %27 = arith.negf %26 : vector<2x128xf32>
    %28 = math.exp %27 : vector<2x128xf32>
    %cst_11 = arith.constant 1.000000e+00 : f32
    %29 = vector.broadcast %cst_11 : f32 to vector<2x128xf32>
    %30 = arith.addf %29, %28 : vector<2x128xf32>
    %31 = arith.divf %29, %30 : vector<2x128xf32>
    %c0_12 = arith.constant 0 : index
    %c0_13 = arith.constant 0 : index
    %32 = vector.load %arg11[%c0_12, %c0_13] : memref<2x128xf32, #tpu.memory_space<vmem>>, vector<2x128xf32>
    %33 = arith.mulf %23, %32 : vector<2x128xf32>
    %34 = arith.mulf %17, %25 : vector<2x128xf32>
    %35 = arith.addf %33, %34 : vector<2x128xf32>
    %36 = math.tanh %35 : vector<2x128xf32>
    %37 = arith.mulf %31, %36 : vector<2x128xf32>
    %c0_14 = arith.constant 0 : index
    %c0_15 = arith.constant 0 : index
    %38 = vector.load %arg10[%c0_14, %c0_15] : memref<2x128xf32, #tpu.memory_space<vmem>>, vector<2x128xf32>
    tpu.vector_store %arg10[%c0_14, %c0_15], %37 {strides = array<i32>} : memref<2x128xf32, #tpu.memory_space<vmem>>, vector<2x128xf32>,
    %c0_16 = arith.constant 0 : index
    %c0_17 = arith.constant 0 : index
    %39 = vector.load %arg11[%c0_16, %c0_17] : memref<2x128xf32, #tpu.memory_space<vmem>>, vector<2x128xf32>
    tpu.vector_store %arg11[%c0_16, %c0_17], %35 {strides = array<i32>} : memref<2x128xf32, #tpu.memory_space<vmem>>, vector<2x128xf32>,
    %c0_18 = arith.constant 0 : index
    %c0_19 = arith.constant 0 : index
    %c0_20 = arith.constant 0 : index
    %40 = vector.load %arg6[%c0_18, %c0_19, %c0_20] : memref<1x2x128xf32, #tpu.memory_space<vmem>>, vector<1x2x128xf32>
    %41 = vector.shape_cast %40 : vector<1x2x128xf32> to vector<2x128xf32>
    %42 = vector.shape_cast %37 : vector<2x128xf32> to vector<1x2x128xf32>
    tpu.vector_store %arg6[%c0_18, %c0_19, %c0_20], %42 {strides = array<i32>} : memref<1x2x128xf32, #tpu.memory_space<vmem>>, vector<1x2x128xf32>,
    %c0_21 = arith.constant 0 : index
    %c0_22 = arith.constant 0 : index
    %43 = vector.load %arg4[%c0_21, %c0_22] : memref<128x128xf32, #tpu.memory_space<vmem>>, vector<128x128xf32>
    %cst_23 = arith.constant dense<0.000000e+00> : vector<2x128xf32>
    %44 = tpu.matmul %37, %43, %cst_23 {dimension_numbers = #tpu.dot_dimension_numbers<[1], [0], [0], [1], [0, 0, 1, 1], [], []>} : vector<2x128xf32>, vector<128x128xf32>, vector<2x128xf32> -> vector<2x128xf32>
    %c0_24 = arith.constant 0 : index
    %c0_25 = arith.constant 0 : index
    %45 = vector.load %arg5[%c0_24, %c0_25] : memref<1x128xf32, #tpu.memory_space<vmem>>, vector<1x128xf32>
    %46 = vector.broadcast %45 : vector<1x128xf32> to vector<2x128xf32>
    %47 = arith.addf %44, %46 : vector<2x128xf32>
    %c0_26 = arith.constant 0 : index
    %c0_27 = arith.constant 0 : index
    %c0_28 = arith.constant 0 : index
    %48 = vector.load %arg7[%c0_26, %c0_27, %c0_28] : memref<1x2x128xf32, #tpu.memory_space<vmem>>, vector<1x2x128xf32>
    %49 = vector.shape_cast %48 : vector<1x2x128xf32> to vector<2x128xf32>
    %50 = vector.shape_cast %47 : vector<2x128xf32> to vector<1x2x128xf32>
    tpu.vector_store %arg7[%c0_26, %c0_27, %c0_28], %50 {strides = array<i32>} : memref<1x2x128xf32, #tpu.memory_space<vmem>>, vector<1x2x128xf32>,
    %c0_29 = arith.constant 0 : index
    %c0_30 = arith.constant 0 : index
    %51 = vector.load %arg8[%c0_29, %c0_30] : memref<2x128xf32, #tpu.memory_space<vmem>>, vector<2x128xf32>
    tpu.vector_store %arg8[%c0_29, %c0_30], %37 {strides = array<i32>} : memref<2x128xf32, #tpu.memory_space<vmem>>, vector<2x128xf32>,
    %c0_31 = arith.constant 0 : index
    %c0_32 = arith.constant 0 : index
    %52 = vector.load %arg9[%c0_31, %c0_32] : memref<2x128xf32, #tpu.memory_space<vmem>>, vector<2x128xf32>
    tpu.vector_store %arg9[%c0_31, %c0_32], %35 {strides = array<i32>} : memref<2x128xf32, #tpu.memory_space<vmem>>, vector<2x128xf32>,
    return
  }
  func.func @transform_0(%arg0: i32) -> (i32, i32, i32) {
    %c0_i32 = arith.constant 0 : i32
    %c0_i32_0 = arith.constant 0 : i32
    %c0_i32_1 = arith.constant 0 : i32
    return %arg0, %c0_i32, %c0_i32_0 : i32, i32, i32
  }
  func.func @transform_1(%arg0: i32) -> (i32, i32) {
    %c0_i32 = arith.constant 0 : i32
    %c0_i32_0 = arith.constant 0 : i32
    %c0_i32_1 = arith.constant 0 : i32
    return %c0_i32, %c0_i32_0 : i32, i32
  }
  func.func @transform_2(%arg0: i32) -> (i32, i32) {
    %c0_i32 = arith.constant 0 : i32
    %c0_i32_0 = arith.constant 0 : i32
    %c0_i32_1 = arith.constant 0 : i32
    return %c0_i32, %c0_i32_0 : i32, i32
  }
  func.func @transform_3(%arg0: i32) -> (i32, i32) {
    %c0_i32 = arith.constant 0 : i32
    %c0_i32_0 = arith.constant 0 : i32
    %c0_i32_1 = arith.constant 0 : i32
    return %c0_i32, %c0_i32_0 : i32, i32
  }
  func.func @transform_4(%arg0: i32) -> (i32, i32) {
    %c0_i32 = arith.constant 0 : i32
    %c0_i32_0 = arith.constant 0 : i32
    %c0_i32_1 = arith.constant 0 : i32
    return %c0_i32, %c0_i32_0 : i32, i32
  }
  func.func @transform_5(%arg0: i32) -> (i32, i32, i32) {
    %c0_i32 = arith.constant 0 : i32
    %c0_i32_0 = arith.constant 0 : i32
    %c0_i32_1 = arith.constant 0 : i32
    return %arg0, %c0_i32, %c0_i32_0 : i32, i32, i32
  }
  func.func @transform_6(%arg0: i32) -> (i32, i32, i32) {
    %c0_i32 = arith.constant 0 : i32
    %c0_i32_0 = arith.constant 0 : i32
    %c0_i32_1 = arith.constant 0 : i32
    return %arg0, %c0_i32, %c0_i32_0 : i32, i32, i32
  }
  func.func @transform_7(%arg0: i32) -> (i32, i32) {
    %c0_i32 = arith.constant 0 : i32
    %c0_i32_0 = arith.constant 0 : i32
    %c0_i32_1 = arith.constant 0 : i32
    return %c0_i32, %c0_i32_0 : i32, i32
  }
  func.func @transform_8(%arg0: i32) -> (i32, i32) {
    %c0_i32 = arith.constant 0 : i32
    %c0_i32_0 = arith.constant 0 : i32
    %c0_i32_1 = arith.constant 0 : i32
    return %c0_i32, %c0_i32_0 : i32, i32
  }
}

module attributes {stable_mosaic.version = 11 : i64} {
  func.func @_decoder_kernel(%arg0: i32, %arg1: memref<1x2x128xf32, #tpu.memory_space<vmem>>, %arg2: memref<2x8x128xf32, #tpu.memory_space<vmem>>, %arg3: memref<2x8x128xf32, #tpu.memory_space<vmem>>, %arg4: memref<2x128xf32, #tpu.memory_space<vmem>>, %arg5: memref<2x128xf32, #tpu.memory_space<vmem>>, %arg6: memref<128x128xf32, #tpu.memory_space<vmem>>, %arg7: memref<1x128xf32, #tpu.memory_space<vmem>>, %arg8: memref<384x512xf32, #tpu.memory_space<vmem>>, %arg9: memref<1x512xf32, #tpu.memory_space<vmem>>, %arg10: memref<128x128xf32, #tpu.memory_space<vmem>>, %arg11: memref<1x128xf32, #tpu.memory_space<vmem>>, %arg12: memref<1x2x128xf32, #tpu.memory_space<vmem>>, %arg13: memref<1x2x8xf32, #tpu.memory_space<vmem>>, %arg14: memref<2x128xf32, #tpu.memory_space<vmem>>, %arg15: memref<2x128xf32, #tpu.memory_space<vmem>>) attributes {dimension_semantics = [#tpu.dimension_semantics<arbitrary>], iteration_bounds = array<i64: 7>, scalar_prefetch = 0 : i64, scratch_operands = 2 : i64, tpu.core_type = #tpu.core_type<tc>, window_params = [{transform_indices = @transform_0, window_bounds = array<i64: 1, 2, 128>}, {pipeline_mode = #tpu.pipeline_mode<synchronous>, transform_indices = @transform_1, window_bounds = array<i64: 2, 8, 128>}, {pipeline_mode = #tpu.pipeline_mode<synchronous>, transform_indices = @transform_2, window_bounds = array<i64: 2, 8, 128>}, {pipeline_mode = #tpu.pipeline_mode<synchronous>, transform_indices = @transform_3, window_bounds = array<i64: 2, 128>}, {pipeline_mode = #tpu.pipeline_mode<synchronous>, transform_indices = @transform_4, window_bounds = array<i64: 2, 128>}, {pipeline_mode = #tpu.pipeline_mode<synchronous>, transform_indices = @transform_5, window_bounds = array<i64: 128, 128>}, {pipeline_mode = #tpu.pipeline_mode<synchronous>, transform_indices = @transform_6, window_bounds = array<i64: 1, 128>}, {pipeline_mode = #tpu.pipeline_mode<synchronous>, transform_indices = @transform_7, window_bounds = array<i64: 384, 512>}, {pipeline_mode = #tpu.pipeline_mode<synchronous>, transform_indices = @transform_8, window_bounds = array<i64: 1, 512>}, {pipeline_mode = #tpu.pipeline_mode<synchronous>, transform_indices = @transform_9, window_bounds = array<i64: 128, 128>}, {pipeline_mode = #tpu.pipeline_mode<synchronous>, transform_indices = @transform_10, window_bounds = array<i64: 1, 128>}, {transform_indices = @transform_11, window_bounds = array<i64: 1, 2, 128>}, {transform_indices = @transform_12, window_bounds = array<i64: 1, 2, 8>}]} {
    %c0_i32 = arith.constant 0 : i32
    %0 = arith.cmpi eq, %arg0, %c0_i32 : i32
    %1 = arith.extui %0 : i1 to i32
    %c0_i32_0 = arith.constant 0 : i32
    %2 = arith.cmpi ne, %1, %c0_i32_0 : i32
    scf.if %2 {
      %c0_44 = arith.constant 0 : index
      %c0_45 = arith.constant 0 : index
      %77 = vector.load %arg4[%c0_44, %c0_45] : memref<2x128xf32, #tpu.memory_space<vmem>>, vector<2x128xf32>
      %c0_46 = arith.constant 0 : index
      %c0_47 = arith.constant 0 : index
      %78 = vector.load %arg14[%c0_46, %c0_47] : memref<2x128xf32, #tpu.memory_space<vmem>>, vector<2x128xf32>
      tpu.vector_store %arg14[%c0_46, %c0_47], %77 {strides = array<i32>} : memref<2x128xf32, #tpu.memory_space<vmem>>, vector<2x128xf32>,
      %c0_48 = arith.constant 0 : index
      %c0_49 = arith.constant 0 : index
      %79 = vector.load %arg5[%c0_48, %c0_49] : memref<2x128xf32, #tpu.memory_space<vmem>>, vector<2x128xf32>
      %c0_50 = arith.constant 0 : index
      %c0_51 = arith.constant 0 : index
      %80 = vector.load %arg15[%c0_50, %c0_51] : memref<2x128xf32, #tpu.memory_space<vmem>>, vector<2x128xf32>
      tpu.vector_store %arg15[%c0_50, %c0_51], %79 {strides = array<i32>} : memref<2x128xf32, #tpu.memory_space<vmem>>, vector<2x128xf32>,
    } else {
    }
    %c0 = arith.constant 0 : index
    %c0_1 = arith.constant 0 : index
    %3 = vector.load %arg14[%c0, %c0_1] : memref<2x128xf32, #tpu.memory_space<vmem>>, vector<2x128xf32>
    %c0_2 = arith.constant 0 : index
    %c0_3 = arith.constant 0 : index
    %4 = vector.load %arg6[%c0_2, %c0_3] : memref<128x128xf32, #tpu.memory_space<vmem>>, vector<128x128xf32>
    %cst = arith.constant dense<0.000000e+00> : vector<2x128xf32>
    %5 = tpu.matmul %3, %4, %cst {dimension_numbers = #tpu.dot_dimension_numbers<[1], [0], [0], [1], [0, 0, 1, 1], [], []>} : vector<2x128xf32>, vector<128x128xf32>, vector<2x128xf32> -> vector<2x128xf32>
    %6 = vector.shape_cast %5 : vector<2x128xf32> to vector<2x1x128xf32>
    %c0_4 = arith.constant 0 : index
    %c0_5 = arith.constant 0 : index
    %c0_6 = arith.constant 0 : index
    %7 = vector.load %arg3[%c0_4, %c0_5, %c0_6] : memref<2x8x128xf32, #tpu.memory_space<vmem>>, vector<2x8x128xf32>
    %8 = vector.broadcast %6 : vector<2x1x128xf32> to vector<2x8x128xf32>
    %9 = arith.addf %8, %7 : vector<2x8x128xf32>
    %10 = math.tanh %9 : vector<2x8x128xf32>
    %c0_7 = arith.constant 0 : index
    %c0_8 = arith.constant 0 : index
    %11 = vector.load %arg7[%c0_7, %c0_8] : memref<1x128xf32, #tpu.memory_space<vmem>>, vector<1x128xf32>
    %12 = vector.shape_cast %11 : vector<1x128xf32> to vector<1x1x128xf32>
    %13 = vector.broadcast %12 : vector<1x1x128xf32> to vector<2x8x128xf32>
    %14 = arith.mulf %10, %13 : vector<2x8x128xf32>
    %cst_9 = arith.constant dense<0.000000e+00> : vector<2x8xf32>
    %15 = vector.multi_reduction <add>, %14, %cst_9 [2] : vector<2x8x128xf32> to vector<2x8xf32>
    %cst_10 = arith.constant dense<0xFF800000> : vector<2xf32>
    %16 = vector.multi_reduction <maximumf>, %15, %cst_10 [1] : vector<2x8xf32> to vector<2xf32>
    %17 = vector.shape_cast %16 : vector<2xf32> to vector<2x1xf32>
    %18 = vector.broadcast %17 : vector<2x1xf32> to vector<2x8xf32>
    %19 = arith.subf %15, %18 : vector<2x8xf32>
    %20 = math.exp %19 : vector<2x8xf32>
    %cst_11 = arith.constant dense<0.000000e+00> : vector<2xf32>
    %21 = vector.multi_reduction <add>, %20, %cst_11 [1] : vector<2x8xf32> to vector<2xf32>
    %22 = vector.shape_cast %21 : vector<2xf32> to vector<2x1xf32>
    %23 = vector.broadcast %22 : vector<2x1xf32> to vector<2x8xf32>
    %24 = arith.divf %20, %23 : vector<2x8xf32>
    %c0_12 = arith.constant 0 : index
    %c0_13 = arith.constant 0 : index
    %c0_14 = arith.constant 0 : index
    %25 = vector.load %arg13[%c0_12, %c0_13, %c0_14] : memref<1x2x8xf32, #tpu.memory_space<vmem>>, vector<1x2x8xf32>
    %26 = vector.shape_cast %25 : vector<1x2x8xf32> to vector<2x8xf32>
    %27 = vector.shape_cast %24 : vector<2x8xf32> to vector<1x2x8xf32>
    tpu.vector_store %arg13[%c0_12, %c0_13, %c0_14], %27 {strides = array<i32>} : memref<1x2x8xf32, #tpu.memory_space<vmem>>, vector<1x2x8xf32>,
    %28 = vector.shape_cast %24 : vector<2x8xf32> to vector<2x8x1xf32>
    %c0_15 = arith.constant 0 : index
    %c0_16 = arith.constant 0 : index
    %c0_17 = arith.constant 0 : index
    %29 = vector.load %arg2[%c0_15, %c0_16, %c0_17] : memref<2x8x128xf32, #tpu.memory_space<vmem>>, vector<2x8x128xf32>
    %30 = vector.broadcast %28 : vector<2x8x1xf32> to vector<2x8x128xf32>
    %31 = arith.mulf %30, %29 : vector<2x8x128xf32>
    %cst_18 = arith.constant dense<0.000000e+00> : vector<2x128xf32>
    %32 = vector.multi_reduction <add>, %31, %cst_18 [1] : vector<2x8x128xf32> to vector<2x128xf32>
    %c0_19 = arith.constant 0 : index
    %c0_20 = arith.constant 0 : index
    %c0_21 = arith.constant 0 : index
    %33 = vector.load %arg1[%c0_19, %c0_20, %c0_21] : memref<1x2x128xf32, #tpu.memory_space<vmem>>, vector<1x2x128xf32>
    %34 = vector.shape_cast %33 : vector<1x2x128xf32> to vector<2x128xf32>
    %35 = tpu.concatenate %34, %32, %3 in 1 : vector<2x128xf32>, vector<2x128xf32>, vector<2x128xf32> -> vector<2x384xf32>
    %c0_22 = arith.constant 0 : index
    %c0_23 = arith.constant 0 : index
    %36 = vector.load %arg8[%c0_22, %c0_23] : memref<384x512xf32, #tpu.memory_space<vmem>>, vector<384x512xf32>
    %cst_24 = arith.constant dense<0.000000e+00> : vector<2x512xf32>
    %37 = tpu.matmul %35, %36, %cst_24 {dimension_numbers = #tpu.dot_dimension_numbers<[1], [0], [0], [1], [0, 0, 1, 1], [], []>} : vector<2x384xf32>, vector<384x512xf32>, vector<2x512xf32> -> vector<2x512xf32>
    %c0_25 = arith.constant 0 : index
    %c0_26 = arith.constant 0 : index
    %38 = vector.load %arg9[%c0_25, %c0_26] : memref<1x512xf32, #tpu.memory_space<vmem>>, vector<1x512xf32>
    %39 = vector.broadcast %38 : vector<1x512xf32> to vector<2x512xf32>
    %40 = arith.addf %37, %39 : vector<2x512xf32>
    %41 = vector.extract_strided_slice %40 {offsets = [0, 0], sizes = [2, 128], strides = [1, 1]} : vector<2x512xf32> to vector<2x128xf32>
    %42 = arith.negf %41 : vector<2x128xf32>
    %43 = math.exp %42 : vector<2x128xf32>
    %cst_27 = arith.constant 1.000000e+00 : f32
    %44 = vector.broadcast %cst_27 : f32 to vector<2x128xf32>
    %45 = arith.addf %44, %43 : vector<2x128xf32>
    %46 = arith.divf %44, %45 : vector<2x128xf32>
    %47 = vector.extract_strided_slice %40 {offsets = [0, 128], sizes = [2, 128], strides = [1, 1]} : vector<2x512xf32> to vector<2x128xf32>
    %48 = arith.negf %47 : vector<2x128xf32>
    %49 = math.exp %48 : vector<2x128xf32>
    %cst_28 = arith.constant 1.000000e+00 : f32
    %50 = vector.broadcast %cst_28 : f32 to vector<2x128xf32>
    %51 = arith.addf %50, %49 : vector<2x128xf32>
    %52 = arith.divf %50, %51 : vector<2x128xf32>
    %53 = vector.extract_strided_slice %40 {offsets = [0, 256], sizes = [2, 128], strides = [1, 1]} : vector<2x512xf32> to vector<2x128xf32>
    %54 = math.tanh %53 : vector<2x128xf32>
    %55 = vector.extract_strided_slice %40 {offsets = [0, 384], sizes = [2, 128], strides = [1, 1]} : vector<2x512xf32> to vector<2x128xf32>
    %56 = arith.negf %55 : vector<2x128xf32>
    %57 = math.exp %56 : vector<2x128xf32>
    %cst_29 = arith.constant 1.000000e+00 : f32
    %58 = vector.broadcast %cst_29 : f32 to vector<2x128xf32>
    %59 = arith.addf %58, %57 : vector<2x128xf32>
    %60 = arith.divf %58, %59 : vector<2x128xf32>
    %c0_30 = arith.constant 0 : index
    %c0_31 = arith.constant 0 : index
    %61 = vector.load %arg15[%c0_30, %c0_31] : memref<2x128xf32, #tpu.memory_space<vmem>>, vector<2x128xf32>
    %62 = arith.mulf %52, %61 : vector<2x128xf32>
    %63 = arith.mulf %46, %54 : vector<2x128xf32>
    %64 = arith.addf %62, %63 : vector<2x128xf32>
    %65 = math.tanh %64 : vector<2x128xf32>
    %66 = arith.mulf %60, %65 : vector<2x128xf32>
    %c0_32 = arith.constant 0 : index
    %c0_33 = arith.constant 0 : index
    %67 = vector.load %arg14[%c0_32, %c0_33] : memref<2x128xf32, #tpu.memory_space<vmem>>, vector<2x128xf32>
    tpu.vector_store %arg14[%c0_32, %c0_33], %66 {strides = array<i32>} : memref<2x128xf32, #tpu.memory_space<vmem>>, vector<2x128xf32>,
    %c0_34 = arith.constant 0 : index
    %c0_35 = arith.constant 0 : index
    %68 = vector.load %arg15[%c0_34, %c0_35] : memref<2x128xf32, #tpu.memory_space<vmem>>, vector<2x128xf32>
    tpu.vector_store %arg15[%c0_34, %c0_35], %64 {strides = array<i32>} : memref<2x128xf32, #tpu.memory_space<vmem>>, vector<2x128xf32>,
    %c0_36 = arith.constant 0 : index
    %c0_37 = arith.constant 0 : index
    %69 = vector.load %arg10[%c0_36, %c0_37] : memref<128x128xf32, #tpu.memory_space<vmem>>, vector<128x128xf32>
    %cst_38 = arith.constant dense<0.000000e+00> : vector<2x128xf32>
    %70 = tpu.matmul %66, %69, %cst_38 {dimension_numbers = #tpu.dot_dimension_numbers<[1], [0], [0], [1], [0, 0, 1, 1], [], []>} : vector<2x128xf32>, vector<128x128xf32>, vector<2x128xf32> -> vector<2x128xf32>
    %c0_39 = arith.constant 0 : index
    %c0_40 = arith.constant 0 : index
    %71 = vector.load %arg11[%c0_39, %c0_40] : memref<1x128xf32, #tpu.memory_space<vmem>>, vector<1x128xf32>
    %72 = vector.broadcast %71 : vector<1x128xf32> to vector<2x128xf32>
    %73 = arith.addf %70, %72 : vector<2x128xf32>
    %c0_41 = arith.constant 0 : index
    %c0_42 = arith.constant 0 : index
    %c0_43 = arith.constant 0 : index
    %74 = vector.load %arg12[%c0_41, %c0_42, %c0_43] : memref<1x2x128xf32, #tpu.memory_space<vmem>>, vector<1x2x128xf32>
    %75 = vector.shape_cast %74 : vector<1x2x128xf32> to vector<2x128xf32>
    %76 = vector.shape_cast %73 : vector<2x128xf32> to vector<1x2x128xf32>
    tpu.vector_store %arg12[%c0_41, %c0_42, %c0_43], %76 {strides = array<i32>} : memref<1x2x128xf32, #tpu.memory_space<vmem>>, vector<1x2x128xf32>,
    return
  }
  func.func @transform_0(%arg0: i32) -> (i32, i32, i32) {
    %c0_i32 = arith.constant 0 : i32
    %c0_i32_0 = arith.constant 0 : i32
    %c0_i32_1 = arith.constant 0 : i32
    return %arg0, %c0_i32, %c0_i32_0 : i32, i32, i32
  }
  func.func @transform_1(%arg0: i32) -> (i32, i32, i32) {
    %c0_i32 = arith.constant 0 : i32
    %c0_i32_0 = arith.constant 0 : i32
    %c0_i32_1 = arith.constant 0 : i32
    %c0_i32_2 = arith.constant 0 : i32
    return %c0_i32, %c0_i32_0, %c0_i32_1 : i32, i32, i32
  }
  func.func @transform_2(%arg0: i32) -> (i32, i32, i32) {
    %c0_i32 = arith.constant 0 : i32
    %c0_i32_0 = arith.constant 0 : i32
    %c0_i32_1 = arith.constant 0 : i32
    %c0_i32_2 = arith.constant 0 : i32
    return %c0_i32, %c0_i32_0, %c0_i32_1 : i32, i32, i32
  }
  func.func @transform_3(%arg0: i32) -> (i32, i32) {
    %c0_i32 = arith.constant 0 : i32
    %c0_i32_0 = arith.constant 0 : i32
    %c0_i32_1 = arith.constant 0 : i32
    return %c0_i32, %c0_i32_0 : i32, i32
  }
  func.func @transform_4(%arg0: i32) -> (i32, i32) {
    %c0_i32 = arith.constant 0 : i32
    %c0_i32_0 = arith.constant 0 : i32
    %c0_i32_1 = arith.constant 0 : i32
    return %c0_i32, %c0_i32_0 : i32, i32
  }
  func.func @transform_5(%arg0: i32) -> (i32, i32) {
    %c0_i32 = arith.constant 0 : i32
    %c0_i32_0 = arith.constant 0 : i32
    %c0_i32_1 = arith.constant 0 : i32
    return %c0_i32, %c0_i32_0 : i32, i32
  }
  func.func @transform_6(%arg0: i32) -> (i32, i32) {
    %c0_i32 = arith.constant 0 : i32
    %c0_i32_0 = arith.constant 0 : i32
    %c0_i32_1 = arith.constant 0 : i32
    return %c0_i32, %c0_i32_0 : i32, i32
  }
  func.func @transform_7(%arg0: i32) -> (i32, i32) {
    %c0_i32 = arith.constant 0 : i32
    %c0_i32_0 = arith.constant 0 : i32
    %c0_i32_1 = arith.constant 0 : i32
    return %c0_i32, %c0_i32_0 : i32, i32
  }
  func.func @transform_8(%arg0: i32) -> (i32, i32) {
    %c0_i32 = arith.constant 0 : i32
    %c0_i32_0 = arith.constant 0 : i32
    %c0_i32_1 = arith.constant 0 : i32
    return %c0_i32, %c0_i32_0 : i32, i32
  }
  func.func @transform_9(%arg0: i32) -> (i32, i32) {
    %c0_i32 = arith.constant 0 : i32
    %c0_i32_0 = arith.constant 0 : i32
    %c0_i32_1 = arith.constant 0 : i32
    return %c0_i32, %c0_i32_0 : i32, i32
  }
  func.func @transform_10(%arg0: i32) -> (i32, i32) {
    %c0_i32 = arith.constant 0 : i32
    %c0_i32_0 = arith.constant 0 : i32
    %c0_i32_1 = arith.constant 0 : i32
    return %c0_i32, %c0_i32_0 : i32, i32
  }
  func.func @transform_11(%arg0: i32) -> (i32, i32, i32) {
    %c0_i32 = arith.constant 0 : i32
    %c0_i32_0 = arith.constant 0 : i32
    %c0_i32_1 = arith.constant 0 : i32
    return %arg0, %c0_i32, %c0_i32_0 : i32, i32, i32
  }
  func.func @transform_12(%arg0: i32) -> (i32, i32, i32) {
    %c0_i32 = arith.constant 0 : i32
    %c0_i32_0 = arith.constant 0 : i32
    %c0_i32_1 = arith.constant 0 : i32
    return %arg0, %c0_i32, %c0_i32_0 : i32, i32, i32
  }
}

</mosaic_0001>

<llo_original>
// kernel: transliteration_forward.2
$region0: #{transliteration_forward.2}
  #allocation0 [shape = 'u32[]', space=smem, size = 0x4, offset = 0x4, fixed_abs, tag = 'smem constant byte address 0x4 - core index']
  #allocation1 [shape = 'u32[144,128]{1,0:T(1,128)}', space=vmem, size = 0x12000, scoped, tag = 'internal scratch']
  #allocation2 [shape = 'f32[2,128]{1,0:T(2,128)}', space=vmem, size = 0x400, scoped, tag = 'scratch operand']
  #allocation3 [shape = 'f32[2,128]{1,0:T(2,128)}', space=vmem, size = 0x400, scoped, tag = 'scratch operand']
  %s0 = inlined_call_operand.vmem [shape: f32[8,2,128], index: 0, kind: input, shape index: {}]
  %s1 = inlined_call_operand.hbm [shape: f32[256,512], index: 1, kind: input, shape index: {}]
  %s2 = inlined_call_operand.vmem [shape: f32[1,512], index: 2, kind: input, shape index: {}]
  %s3 = inlined_call_operand.vmem [shape: f32[128,128], index: 3, kind: input, shape index: {}]
  %s4 = inlined_call_operand.vmem [shape: f32[1,128], index: 4, kind: input, shape index: {}]
  %s5 = inlined_call_operand.vmem [shape: f32[8,2,128], index: 5, kind: output, shape index: {0}]
  %s6 = inlined_call_operand.vmem [shape: f32[8,2,128], index: 6, kind: output, shape index: {1}]
  %s7 = inlined_call_operand.vmem [shape: f32[2,128], index: 7, kind: output, shape index: {2}]
  %s8 = inlined_call_operand.vmem [shape: f32[2,128], index: 8, kind: output, shape index: {3}]
  %9 = xla_tuple %s5, %s6, %s7, %s8
  %s10 = sld [smem:[#allocation0]]
  $region85: #{transliteration_forward.2} parent=0
    _
  %s12 = ssub.s32 1, %s10
  %s13 = scalar_select 0, %s12, %s10
  $region1: #{transliteration_forward.2} parent=0
    #allocation4 [shape = 'u8[524288]{0}', space=vmem, size = 0x80000, scoped, tag = 'input window, operand 1, single buffered']
    #allocation5 [shape = 's32[2]{0}', space=sflag, size = 0x8, scoped, tag = 'scoped memory for transliteration_forward.2']
    %14 = vsyncpa [#allocation5], 0
    loop: start=0, step=1, limit=10
    $region2: #{transliteration_forward.2} parent=1 // loop_pre_header
      _
    $region3: #{transliteration_forward.2} parent=1 // loop_header
      %s16 = sphi 0, %s20
      %p17 = scmp.ge.s32.totalorder %s16, 10
      %s26 = sphi 0, %s28
      %s29 = sphi 0, %s26
      %s30 = sphi 0, %s29
      %s46 = sphi 0, %s30
      %s50 = sphi 0, %s50
      %s52 = sphi 0, %s50
      %s53 = sphi 0, %s52
      %s67 = sphi 0, %s53
      %s71 = sphi 0, %s71
      %s73 = sphi 0, %s71
      %s74 = sphi 0, %s73
      %s88 = sphi 0, %s74
      %s92 = sphi 0, %s92
      %s94 = sphi 0, %s92
      %s95 = sphi 0, %s94
      %s109 = sphi 0, %s95
      %s113 = sphi 0, %s113
      %s115 = sphi 0, %s113
      %s116 = sphi 0, %s115
      %s130 = sphi 0, %s116
      %s136 = sphi 0, %s138
      %s139 = sphi 0, %s136
      %s140 = sphi 0, %s139
      %s156 = sphi 0, %s140
      %s162 = sphi 0, %s164
      %s165 = sphi 0, %s162
      %s166 = sphi 0, %s165
      %s182 = sphi 0, %s166
      %s186 = sphi 0, %s186
      %s188 = sphi 0, %s186
      %s189 = sphi 0, %s188
      %s203 = sphi 0, %s189
      %s207 = sphi 0, %s207
      %s209 = sphi 0, %s207
      %s210 = sphi 0, %s209
      %s224 = sphi 0, %s210
    $region4: #{transliteration_forward.2} parent=1 // loop_header_branch
      %19 = sbr.rel (%p17) target = $region8
    $region5: #{transliteration_forward.2} parent=1 // loop_body
      %s21 = ssub.s32 %s16, 1
      %s22 = ssub.s32 %s16, 2
      %s23 = sadd.s32 %s16, 1
      %s24 = ssub.s32 %s16, %s23
      %p25 = scmp.eq.s32.totalorder %s24, 0
      %s27 = sadd.s32 %s26, 1
      %s28 = scalar_select %p25, %s26, %s27
      %p31 = pneg %p25
      %p32 = scmp.eq.s32.totalorder %s16, 7
      %p33 = por %p31, %p32
      %p34 = scmp.ne.s32.totalorder %s26, %s29
      %p35 = scmp.eq.s32.totalorder %s16, 0
      %p36 = por %p34, %p35
      %p37 = scmp.ne.s32.totalorder %s26, %s29
      %p38 = scmp.eq.s32.totalorder %s21, 7
      %p39 = por %p37, %p38
      %p40 = scmp.ne.s32.totalorder %s29, %s30
      %p41 = scmp.eq.s32.totalorder %s21, 0
      %p42 = por %p40, %p41
      %p43 = scmp.ne.s32.totalorder %s29, %s30
      %p44 = scmp.eq.s32.totalorder %s22, 7
      %p45 = por %p43, %p44
      %p47 = scmp.ne.s32.totalorder %s30, %s46
      %p48 = scmp.eq.s32.totalorder %s22, 0
      %p49 = por %p47, %p48
      %s51 = sadd.s32 %s50, 1
      %p54 = scmp.eq.s32.totalorder %s16, 7
      %p55 = scmp.ne.s32.totalorder %s50, %s52
      %p56 = scmp.eq.s32.totalorder %s16, 0
      %p57 = por %p55, %p56
      %p58 = scmp.ne.s32.totalorder %s50, %s52
      %p59 = scmp.eq.s32.totalorder %s21, 7
      %p60 = por %p58, %p59
      %p61 = scmp.ne.s32.totalorder %s52, %s53
      %p62 = scmp.eq.s32.totalorder %s21, 0
      %p63 = por %p61, %p62
      %p64 = scmp.ne.s32.totalorder %s52, %s53
      %p65 = scmp.eq.s32.totalorder %s22, 7
      %p66 = por %p64, %p65
      %p68 = scmp.ne.s32.totalorder %s53, %s67
      %p69 = scmp.eq.s32.totalorder %s22, 0
      %p70 = por %p68, %p69
      %s72 = sadd.s32 %s71, 1
      %p75 = scmp.eq.s32.totalorder %s16, 7
      %p76 = scmp.ne.s32.totalorder %s71, %s73
      %p77 = scmp.eq.s32.totalorder %s16, 0
      %p78 = por %p76, %p77
      %p79 = scmp.ne.s32.totalorder %s71, %s73
      %p80 = scmp.eq.s32.totalorder %s21, 7
      %p81 = por %p79, %p80
      %p82 = scmp.ne.s32.totalorder %s73, %s74
      %p83 = scmp.eq.s32.totalorder %s21, 0
      %p84 = por %p82, %p83
      %p85 = scmp.ne.s32.totalorder %s73, %s74
      %p86 = scmp.eq.s32.totalorder %s22, 7
      %p87 = por %p85, %p86
      %p89 = scmp.ne.s32.totalorder %s74, %s88
      %p90 = scmp.eq.s32.totalorder %s22, 0
      %p91 = por %p89, %p90
      %s93 = sadd.s32 %s92, 1
      %p96 = scmp.eq.s32.totalorder %s16, 7
      %p97 = scmp.ne.s32.totalorder %s92, %s94
      %p98 = scmp.eq.s32.totalorder %s16, 0
      %p99 = por %p97, %p98
      %p100 = scmp.ne.s32.totalorder %s92, %s94
      %p101 = scmp.eq.s32.totalorder %s21, 7
      %p102 = por %p100, %p101
      %p103 = scmp.ne.s32.totalorder %s94, %s95
      %p104 = scmp.eq.s32.totalorder %s21, 0
      %p105 = por %p103, %p104
      %p106 = scmp.ne.s32.totalorder %s94, %s95
      %p107 = scmp.eq.s32.totalorder %s22, 7
      %p108 = por %p106, %p107
      %p110 = scmp.ne.s32.totalorder %s95, %s109
      %p111 = scmp.eq.s32.totalorder %s22, 0
      %p112 = por %p110, %p111
      %s114 = sadd.s32 %s113, 1
      %p117 = scmp.eq.s32.totalorder %s16, 7
      %p118 = scmp.ne.s32.totalorder %s113, %s115
      %p119 = scmp.eq.s32.totalorder %s16, 0
      %p120 = por %p118, %p119
      %p121 = scmp.ne.s32.totalorder %s113, %s115
      %p122 = scmp.eq.s32.totalorder %s21, 7
      %p123 = por %p121, %p122
      %p124 = scmp.ne.s32.totalorder %s115, %s116
      %p125 = scmp.eq.s32.totalorder %s21, 0
      %p126 = por %p124, %p125
      %p127 = scmp.ne.s32.totalorder %s115, %s116
      %p128 = scmp.eq.s32.totalorder %s22, 7
      %p129 = por %p127, %p128
      %p131 = scmp.ne.s32.totalorder %s116, %s130
      %p132 = scmp.eq.s32.totalorder %s22, 0
      %p133 = por %p131, %p132
      %s134 = ssub.s32 %s16, %s23
      %p135 = scmp.eq.s32.totalorder %s134, 0
      %s137 = sadd.s32 %s136, 1
      %s138 = scalar_select %p135, %s136, %s137
      %p141 = pneg %p135
      %p142 = scmp.eq.s32.totalorder %s16, 7
      %p143 = por %p141, %p142
      %p144 = scmp.ne.s32.totalorder %s136, %s139
      %p145 = scmp.eq.s32.totalorder %s16, 0
      %p146 = por %p144, %p145
      %p147 = scmp.ne.s32.totalorder %s136, %s139
      %p148 = scmp.eq.s32.totalorder %s21, 7
      %p149 = por %p147, %p148
      %p150 = scmp.ne.s32.totalorder %s139, %s140
      %p151 = scmp.eq.s32.totalorder %s21, 0
      %p152 = por %p150, %p151
      %p153 = scmp.ne.s32.totalorder %s139, %s140
      %p154 = scmp.eq.s32.totalorder %s22, 7
      %p155 = por %p153, %p154
      %p157 = scmp.ne.s32.totalorder %s140, %s156
      %p158 = scmp.eq.s32.totalorder %s22, 0
      %p159 = por %p157, %p158
      %s160 = ssub.s32 %s16, %s23
      %p161 = scmp.eq.s32.totalorder %s160, 0
      %s163 = sadd.s32 %s162, 1
      %s164 = scalar_select %p161, %s162, %s163
      %p167 = pneg %p161
      %p168 = scmp.eq.s32.totalorder %s16, 7
      %p169 = por %p167, %p168
      %p170 = scmp.ne.s32.totalorder %s162, %s165
      %p171 = scmp.eq.s32.totalorder %s16, 0
      %p172 = por %p170, %p171
      %p173 = scmp.ne.s32.totalorder %s162, %s165
      %p174 = scmp.eq.s32.totalorder %s21, 7
      %p175 = por %p173, %p174
      %p176 = scmp.ne.s32.totalorder %s165, %s166
      %p177 = scmp.eq.s32.totalorder %s21, 0
      %p178 = por %p176, %p177
      %p179 = scmp.ne.s32.totalorder %s165, %s166
      %p180 = scmp.eq.s32.totalorder %s22, 7
      %p181 = por %p179, %p180
      %p183 = scmp.ne.s32.totalorder %s166, %s182
      %p184 = scmp.eq.s32.totalorder %s22, 0
      %p185 = por %p183, %p184
      %s187 = sadd.s32 %s186, 1
      %p190 = scmp.eq.s32.totalorder %s16, 7
      %p191 = scmp.ne.s32.totalorder %s186, %s188
      %p192 = scmp.eq.s32.totalorder %s16, 0
      %p193 = por %p191, %p192
      %p194 = scmp.ne.s32.totalorder %s186, %s188
      %p195 = scmp.eq.s32.totalorder %s21, 7
      %p196 = por %p194, %p195
      %p197 = scmp.ne.s32.totalorder %s188, %s189
      %p198 = scmp.eq.s32.totalorder %s21, 0
      %p199 = por %p197, %p198
      %p200 = scmp.ne.s32.totalorder %s188, %s189
      %p201 = scmp.eq.s32.totalorder %s22, 7
      %p202 = por %p200, %p201
      %p204 = scmp.ne.s32.totalorder %s189, %s203
      %p205 = scmp.eq.s32.totalorder %s22, 0
      %p206 = por %p204, %p205
      %s208 = sadd.s32 %s207, 1
      %p211 = scmp.eq.s32.totalorder %s16, 7
      %p212 = scmp.ne.s32.totalorder %s207, %s209
      %p213 = scmp.eq.s32.totalorder %s16, 0
      %p214 = por %p212, %p213
      %p215 = scmp.ne.s32.totalorder %s207, %s209
      %p216 = scmp.eq.s32.totalorder %s21, 7
      %p217 = por %p215, %p216
      %p218 = scmp.ne.s32.totalorder %s209, %s210
      %p219 = scmp.eq.s32.totalorder %s21, 0
      %p220 = por %p218, %p219
      %p221 = scmp.ne.s32.totalorder %s209, %s210
      %p222 = scmp.eq.s32.totalorder %s22, 7
      %p223 = por %p221, %p222
      %p225 = scmp.ne.s32.totalorder %s210, %s224
      %p226 = scmp.eq.s32.totalorder %s22, 0
      %p227 = por %p225, %p226
      %p228 = scmp.le.s32.totalorder 1, %s16
      %p229 = scmp.lt.s32.totalorder %s16, 9
      %p230 = pnand %p228, %p229
      %p231 = pneg %p230
      // Predicated region
      $region9: #{transliteration_forward.2} parent=5 // pred_check
        _
      $region10: #{transliteration_forward.2} parent=5 // pred_check_branch
        %233 = sbr.rel (%p230) target = $region12
      $region11: #{transliteration_forward.2} parent=5 // pred_region
        %s234 = ssub.s32 %s16, 1
        // Predicated region
        $region13: #{transliteration_forward.2} parent=11 // pred_check
          %p235 = pneg %p63
        $region14: #{transliteration_forward.2} parent=11 // pred_check_branch
          %237 = sbr.rel (%p235) target = $region16
        $region15: #{transliteration_forward.2} parent=11 // pred_region
          %s239 = ssub.s32 16384, 16384
          %240 = vsyncadd [#allocation5], %s239
          %s241 = sshll.u32 [#allocation4], 4
          %s242 = int_to_ptr.vmem [resolvable:$true] %s241
          %247 = dma.hbm_to_vmem [thread:$0]  %s1, 16384, %s242, [#allocation5], 512, 512, 32
        $region16: #{transliteration_forward.2} parent=11 // pred_fallthru
          _
        // Predicated region
        $region17: #{transliteration_forward.2} parent=11 // pred_check
          %p248 = pneg %p84
        $region18: #{transliteration_forward.2} parent=11 // pred_check_branch
          %250 = sbr.rel (%p248) target = $region20
        $region19: #{transliteration_forward.2} parent=11 // pred_region
          _
        $region20: #{transliteration_forward.2} parent=11 // pred_fallthru
          _
        // Predicated region
        $region21: #{transliteration_forward.2} parent=11 // pred_check
          %p251 = pneg %p105
        $region22: #{transliteration_forward.2} parent=11 // pred_check_branch
          %253 = sbr.rel (%p251) target = $region24
        $region23: #{transliteration_forward.2} parent=11 // pred_region
          _
        $region24: #{transliteration_forward.2} parent=11 // pred_fallthru
          _
        // Predicated region
        $region25: #{transliteration_forward.2} parent=11 // pred_check
          %p254 = pneg %p126
        $region26: #{transliteration_forward.2} parent=11 // pred_check_branch
          %256 = sbr.rel (%p254) target = $region28
        $region27: #{transliteration_forward.2} parent=11 // pred_region
          _
        $region28: #{transliteration_forward.2} parent=11 // pred_fallthru
          _
      $region12: #{transliteration_forward.2} parent=5 // pred_fallthru
        _
      %p257 = scmp.lt.s32.totalorder %s16, 8
      // Predicated region
      $region29: #{transliteration_forward.2} parent=5 // pred_check
        %p258 = pneg %p257
      $region30: #{transliteration_forward.2} parent=5 // pred_check_branch
        %260 = sbr.rel (%p258) target = $region32
      $region31: #{transliteration_forward.2} parent=5 // pred_region
        // Predicated region
        $region33: #{transliteration_forward.2} parent=31 // pred_check
          %p261 = pneg %p36
        $region34: #{transliteration_forward.2} parent=31 // pred_check_branch
          %263 = sbr.rel (%p261) target = $region36
        $region35: #{transliteration_forward.2} parent=31 // pred_region
          %p264 = scmp.lt.s32.totalorder %s16, 7
          %s265 = scalar_select %p264, %s16, 7
          %s266 = smul.addr %s265, 2
          %s267 = scalar_lea.vmem %s0, %s266
        $region36: #{transliteration_forward.2} parent=31 // pred_fallthru
          _
      $region32: #{transliteration_forward.2} parent=5 // pred_fallthru
        _
      %p268 = scmp.le.s32.totalorder 1, %s16
      %p269 = scmp.lt.s32.totalorder %s16, 9
      %p270 = pnand %p268, %p269
      %p271 = pneg %p270
      // Predicated region
      $region37: #{transliteration_forward.2} parent=5 // pred_check
        _
      $region38: #{transliteration_forward.2} parent=5 // pred_check_branch
        %273 = sbr.rel (%p270) target = $region40
      $region39: #{transliteration_forward.2} parent=5 // pred_region
        %s274 = ssub.s32 %s16, 1
        // Predicated region
        $region41: #{transliteration_forward.2} parent=39 // pred_check
          %p275 = pneg %p63
        $region42: #{transliteration_forward.2} parent=39 // pred_check_branch
          %277 = sbr.rel (%p275) target = $region44
        $region43: #{transliteration_forward.2} parent=39 // pred_region
          %278 = dma.done [#allocation5], 16384
        $region44: #{transliteration_forward.2} parent=39 // pred_fallthru
          _
        %p279 = scmp.lt.s32.totalorder %s21, 7
        %s280 = scalar_select %p279, %s21, 7
        %s281 = smul.addr %s280, 2
        %s282 = scalar_lea.vmem %s0, %s281
        %p283 = pneg %p42
        %p284 = pneg %p39
        %p285 = pneg %p63
        %p286 = pneg %p60
        %p287 = pneg %p84
        %p288 = pneg %p81
        %p289 = pneg %p105
        %p290 = pneg %p102
        %p291 = pneg %p126
        %p292 = pneg %p123
        %p293 = pneg %p152
        %p294 = pneg %p149
        %p295 = scmp.lt.s32.totalorder %s21, 7
        %s296 = scalar_select %p295, %s21, 7
        %s297 = smul.addr %s296, 2
        %s298 = scalar_lea.vmem %s5, %s297
        %p299 = pneg %p178
        %p300 = pneg %p175
        %p301 = scmp.lt.s32.totalorder %s21, 7
        %s302 = scalar_select %p301, %s21, 7
        %s303 = smul.addr %s302, 2
        %s304 = scalar_lea.vmem %s6, %s303
        %p305 = pneg %p199
        %p306 = pneg %p196
        %p307 = pneg %p220
        %p308 = pneg %p217
        %p309 = scmp.lt.s32.totalorder %s21, 7
        %s310 = scalar_select %p309, %s21, 7
        %s311 = smul.addr %s310, 2
        %s312 = scalar_lea.vmem %s0, %s311
        %p313 = scmp.lt.s32.totalorder %s21, 7
        %s314 = scalar_select %p313, %s21, 7
        %s315 = smul.addr %s314, 2
        %s316 = scalar_lea.vmem %s5, %s315
        %p317 = scmp.lt.s32.totalorder %s21, 7
        %s318 = scalar_select %p317, %s21, 7
        %s319 = smul.addr %s318, 2
        %s320 = scalar_lea.vmem %s6, %s319
        %p321 = scmp.eq.s32.totalorder %s21, 0
        // Predicated region
        $region45: #{transliteration_forward.2} parent=39 // pred_check
          %p322 = pneg %p321
        $region46: #{transliteration_forward.2} parent=39 // pred_check_branch
          %324 = sbr.rel (%p322) target = $region48
        $region47: #{transliteration_forward.2} parent=39 // pred_region
          %325 = vst [vmem:[#allocation2] sm:$0x3] 0.0
          %326 = vst [vmem:[#allocation3] sm:$0x3] 0.0
        $region48: #{transliteration_forward.2} parent=39 // pred_fallthru
          _
        %v327 = vld [vmem:[%s312] sm:$0x3]
        %v328 = vld [vmem:[#allocation2] sm:$0x3]
        %v329 = vld [vmem:[#allocation4] sm:$0xff]
        %v330 = vld [vmem:[#allocation4 + $0x8] sm:$0xff]
        %v331 = vld [vmem:[#allocation4 + $0x10] sm:$0xff]
        %v332 = vld [vmem:[#allocation4 + $0x18] sm:$0xff]
        %v333 = vld [vmem:[#allocation4 + $0x20] sm:$0xff]
        %v334 = vld [vmem:[#allocation4 + $0x28] sm:$0xff]
        %v335 = vld [vmem:[#allocation4 + $0x30] sm:$0xff]
        %v336 = vld [vmem:[#allocation4 + $0x38] sm:$0xff]
        %v337 = vld [vmem:[#allocation4 + $0x40] sm:$0xff]
        %v338 = vld [vmem:[#allocation4 + $0x48] sm:$0xff]
        %v339 = vld [vmem:[#allocation4 + $0x50] sm:$0xff]
        %v340 = vld [vmem:[#allocation4 + $0x58] sm:$0xff]
        %v341 = vld [vmem:[#allocation4 + $0x60] sm:$0xff]
        %v342 = vld [vmem:[#allocation4 + $0x68] sm:$0xff]
        %v343 = vld [vmem:[#allocation4 + $0x70] sm:$0xff]
        %v344 = vld [vmem:[#allocation4 + $0x78] sm:$0xff]
        %v345 = vld [vmem:[#allocation4 + $0x80] sm:$0xff]
        %v346 = vld [vmem:[#allocation4 + $0x88] sm:$0xff]
        %v347 = vld [vmem:[#allocation4 + $0x90] sm:$0xff]
        %v348 = vld [vmem:[#allocation4 + $0x98] sm:$0xff]
        %v349 = vld [vmem:[#allocation4 + $0xa0] sm:$0xff]
        %v350 = vld [vmem:[#allocation4 + $0xa8] sm:$0xff]
        %v351 = vld [vmem:[#allocation4 + $0xb0] sm:$0xff]
        %v352 = vld [vmem:[#allocation4 + $0xb8] sm:$0xff]
        %v353 = vld [vmem:[#allocation4 + $0xc0] sm:$0xff]
        %v354 = vld [vmem:[#allocation4 + $0xc8] sm:$0xff]
        %v355 = vld [vmem:[#allocation4 + $0xd0] sm:$0xff]
        %v356 = vld [vmem:[#allocation4 + $0xd8] sm:$0xff]
        %v357 = vld [vmem:[#allocation4 + $0xe0] sm:$0xff]
        %v358 = vld [vmem:[#allocation4 + $0xe8] sm:$0xff]
        %v359 = vld [vmem:[#allocation4 + $0xf0] sm:$0xff]
        %v360 = vld [vmem:[#allocation4 + $0xf8] sm:$0xff]
        %v361 = vld [vmem:[#allocation4 + $0x100] sm:$0xff]
        %v362 = vld [vmem:[#allocation4 + $0x108] sm:$0xff]
        %v363 = vld [vmem:[#allocation4 + $0x110] sm:$0xff]
        %v364 = vld [vmem:[#allocation4 + $0x118] sm:$0xff]
        %v365 = vld [vmem:[#allocation4 + $0x120] sm:$0xff]
        %v366 = vld [vmem:[#allocation4 + $0x128] sm:$0xff]
        %v367 = vld [vmem:[#allocation4 + $0x130] sm:$0xff]
        %v368 = vld [vmem:[#allocation4 + $0x138] sm:$0xff]
        %v369 = vld [vmem:[#allocation4 + $0x140] sm:$0xff]
        %v370 = vld [vmem:[#allocation4 + $0x148] sm:$0xff]
        %v371 = vld [vmem:[#allocation4 + $0x150] sm:$0xff]
        %v372 = vld [vmem:[#allocation4 + $0x158] sm:$0xff]
        %v373 = vld [vmem:[#allocation4 + $0x160] sm:$0xff]
        %v374 = vld [vmem:[#allocation4 + $0x168] sm:$0xff]
        %v375 = vld [vmem:[#allocation4 + $0x170] sm:$0xff]
        %v376 = vld [vmem:[#allocation4 + $0x178] sm:$0xff]
        %v377 = vld [vmem:[#allocation4 + $0x180] sm:$0xff]
        %v378 = vld [vmem:[#allocation4 + $0x188] sm:$0xff]
        %v379 = vld [vmem:[#allocation4 + $0x190] sm:$0xff]
        %v380 = vld [vmem:[#allocation4 + $0x198] sm:$0xff]
        %v381 = vld [vmem:[#allocation4 + $0x1a0] sm:$0xff]
        %v382 = vld [vmem:[#allocation4 + $0x1a8] sm:$0xff]
        %v383 = vld [vmem:[#allocation4 + $0x1b0] sm:$0xff]
        %v384 = vld [vmem:[#allocation4 + $0x1b8] sm:$0xff]
        %v385 = vld [vmem:[#allocation4 + $0x1c0] sm:$0xff]
        %v386 = vld [vmem:[#allocation4 + $0x1c8] sm:$0xff]
        %v387 = vld [vmem:[#allocation4 + $0x1d0] sm:$0xff]
        %v388 = vld [vmem:[#allocation4 + $0x1d8] sm:$0xff]
        %v389 = vld [vmem:[#allocation4 + $0x1e0] sm:$0xff]
        %v390 = vld [vmem:[#allocation4 + $0x1e8] sm:$0xff]
        %v391 = vld [vmem:[#allocation4 + $0x1f0] sm:$0xff]
        %v392 = vld [vmem:[#allocation4 + $0x1f8] sm:$0xff]
        %v393 = vld [vmem:[#allocation4 + $0x200] sm:$0xff]
        %v394 = vld [vmem:[#allocation4 + $0x208] sm:$0xff]
        %v395 = vld [vmem:[#allocation4 + $0x210] sm:$0xff]
        %v396 = vld [vmem:[#allocation4 + $0x218] sm:$0xff]
        %v397 = vld [vmem:[#allocation4 + $0x220] sm:$0xff]
        %v398 = vld [vmem:[#allocation4 + $0x228] sm:$0xff]
        %v399 = vld [vmem:[#allocation4 + $0x230] sm:$0xff]
        %v400 = vld [vmem:[#allocation4 + $0x238] sm:$0xff]
        %v401 = vld [vmem:[#allocation4 + $0x240] sm:$0xff]
        %v402 = vld [vmem:[#allocation4 + $0x248] sm:$0xff]
        %v403 = vld [vmem:[#allocation4 + $0x250] sm:$0xff]
        %v404 = vld [vmem:[#allocation4 + $0x258] sm:$0xff]
        %v405 = vld [vmem:[#allocation4 + $0x260] sm:$0xff]
        %v406 = vld [vmem:[#allocation4 + $0x268] sm:$0xff]
        %v407 = vld [vmem:[#allocation4 + $0x270] sm:$0xff]
        %v408 = vld [vmem:[#allocation4 + $0x278] sm:$0xff]
        %v409 = vld [vmem:[#allocation4 + $0x280] sm:$0xff]
        %v410 = vld [vmem:[#allocation4 + $0x288] sm:$0xff]
        %v411 = vld [vmem:[#allocation4 + $0x290] sm:$0xff]
        %v412 = vld [vmem:[#allocation4 + $0x298] sm:$0xff]
        %v413 = vld [vmem:[#allocation4 + $0x2a0] sm:$0xff]
        %v414 = vld [vmem:[#allocation4 + $0x2a8] sm:$0xff]
        %v415 = vld [vmem:[#allocation4 + $0x2b0] sm:$0xff]
        %v416 = vld [vmem:[#allocation4 + $0x2b8] sm:$0xff]
        %v417 = vld [vmem:[#allocation4 + $0x2c0] sm:$0xff]
        %v418 = vld [vmem:[#allocation4 + $0x2c8] sm:$0xff]
        %v419 = vld [vmem:[#allocation4 + $0x2d0] sm:$0xff]
        %v420 = vld [vmem:[#allocation4 + $0x2d8] sm:$0xff]
        %v421 = vld [vmem:[#allocation4 + $0x2e0] sm:$0xff]
        %v422 = vld [vmem:[#allocation4 + $0x2e8] sm:$0xff]
        %v423 = vld [vmem:[#allocation4 + $0x2f0] sm:$0xff]
        %v424 = vld [vmem:[#allocation4 + $0x2f8] sm:$0xff]
        %v425 = vld [vmem:[#allocation4 + $0x300] sm:$0xff]
        %v426 = vld [vmem:[#allocation4 + $0x308] sm:$0xff]
        %v427 = vld [vmem:[#allocation4 + $0x310] sm:$0xff]
        %v428 = vld [vmem:[#allocation4 + $0x318] sm:$0xff]
        %v429 = vld [vmem:[#allocation4 + $0x320] sm:$0xff]
        %v430 = vld [vmem:[#allocation4 + $0x328] sm:$0xff]
        %v431 = vld [vmem:[#allocation4 + $0x330] sm:$0xff]
        %v432 = vld [vmem:[#allocation4 + $0x338] sm:$0xff]
        %v433 = vld [vmem:[#allocation4 + $0x340] sm:$0xff]
        %v434 = vld [vmem:[#allocation4 + $0x348] sm:$0xff]
        %v435 = vld [vmem:[#allocation4 + $0x350] sm:$0xff]
        %v436 = vld [vmem:[#allocation4 + $0x358] sm:$0xff]
        %v437 = vld [vmem:[#allocation4 + $0x360] sm:$0xff]
        %v438 = vld [vmem:[#allocation4 + $0x368] sm:$0xff]
        %v439 = vld [vmem:[#allocation4 + $0x370] sm:$0xff]
        %v440 = vld [vmem:[#allocation4 + $0x378] sm:$0xff]
        %v441 = vld [vmem:[#allocation4 + $0x380] sm:$0xff]
        %v442 = vld [vmem:[#allocation4 + $0x388] sm:$0xff]
        %v443 = vld [vmem:[#allocation4 + $0x390] sm:$0xff]
        %v444 = vld [vmem:[#allocation4 + $0x398] sm:$0xff]
        %v445 = vld [vmem:[#allocation4 + $0x3a0] sm:$0xff]
        %v446 = vld [vmem:[#allocation4 + $0x3a8] sm:$0xff]
        %v447 = vld [vmem:[#allocation4 + $0x3b0] sm:$0xff]
        %v448 = vld [vmem:[#allocation4 + $0x3b8] sm:$0xff]
        %v449 = vld [vmem:[#allocation4 + $0x3c0] sm:$0xff]
        %v450 = vld [vmem:[#allocation4 + $0x3c8] sm:$0xff]
        %v451 = vld [vmem:[#allocation4 + $0x3d0] sm:$0xff]
        %v452 = vld [vmem:[#allocation4 + $0x3d8] sm:$0xff]
        %v453 = vld [vmem:[#allocation4 + $0x3e0] sm:$0xff]
        %v454 = vld [vmem:[#allocation4 + $0x3e8] sm:$0xff]
        %v455 = vld [vmem:[#allocation4 + $0x3f0] sm:$0xff]
        %v456 = vld [vmem:[#allocation4 + $0x3f8] sm:$0xff]
        %v457 = vld [vmem:[%s2] sm:$0xf]
        %v459 = vlaneseq
        %v460 = vshrl.u32 %v459, 7
        %v461 = vsub.s32 0, %v460
        %v462 = vrot.slane %v457, %v461
        %v463 = vlaneseq
        %v464 = vshrl.u32 %v463, 7
        %v465 = vsub.s32 1, %v464
        %v466 = vrot.slane %v457, %v465
        %v467 = vlaneseq
        %v468 = vshrl.u32 %v467, 7
        %v469 = vsub.s32 2, %v468
        %v470 = vrot.slane %v457, %v469
        %v471 = vlaneseq
        %v472 = vshrl.u32 %v471, 7
        %v473 = vsub.s32 3, %v472
        %v474 = vrot.slane %v457, %v473
        %479 = vmatprep.subr.mxu0 %v390
        %480 = vmatpush1.msra.mxu0 %v389
        %481 = vmatprep.subr.mxu0 %v386
        %482 = vmatpush1.msra.mxu0 %v385
        %483 = vmatprep.subr.mxu0 %v382
        %484 = vmatpush1.msra.mxu0 %v381
        %485 = vmatprep.subr.mxu0 %v378
        %486 = vmatpush1.msra.mxu0 %v377
        %487 = vmatprep.subr.mxu0 %v374
        %488 = vmatpush1.msra.mxu0 %v373
        %489 = vmatprep.subr.mxu0 %v370
        %490 = vmatpush1.msra.mxu0 %v369
        %491 = vmatprep.subr.mxu0 %v366
        %492 = vmatpush1.msra.mxu0 %v365
        %493 = vmatprep.subr.mxu0 %v362
        %494 = vmatpush1.msra.mxu0 %v361
        %495 = vmatprep.subr.mxu0 %v358
        %496 = vmatpush1.msra.mxu0 %v357
        %497 = vmatprep.subr.mxu0 %v354
        %498 = vmatpush1.msra.mxu0 %v353
        %499 = vmatprep.subr.mxu0 %v350
        %500 = vmatpush1.msra.mxu0 %v349
        %501 = vmatprep.subr.mxu0 %v346
        %502 = vmatpush1.msra.mxu0 %v345
        %503 = vmatprep.subr.mxu0 %v342
        %504 = vmatpush1.msra.mxu0 %v341
        %505 = vmatprep.subr.mxu0 %v338
        %506 = vmatpush1.msra.mxu0 %v337
        %507 = vmatprep.subr.mxu0 %v334
        %508 = vmatpush1.msra.mxu0 %v333
        %509 = vmatprep.subr.mxu0 %v330
        %510 = vmatpush1.msra.mxu0 %v329
        %511 = vmatprep.subr.mxu0 %v454
        %512 = vmatpush2.msra.mxu0 %v453
        %513 = vmatprep.subr.mxu0 %v450
        %514 = vmatpush2.msra.mxu0 %v449
        %515 = vmatprep.subr.mxu0 %v446
        %516 = vmatpush2.msra.mxu0 %v445
        %517 = vmatprep.subr.mxu0 %v442
        %518 = vmatpush2.msra.mxu0 %v441
        %519 = vmatprep.subr.mxu0 %v438
        %520 = vmatpush2.msra.mxu0 %v437
        %521 = vmatprep.subr.mxu0 %v434
        %522 = vmatpush2.msra.mxu0 %v433
        %523 = vmatprep.subr.mxu0 %v430
        %524 = vmatpush2.msra.mxu0 %v429
        %525 = vmatprep.subr.mxu0 %v426
        %526 = vmatpush2.msra.mxu0 %v425
        %527 = vmatprep.subr.mxu0 %v422
        %528 = vmatpush2.msra.mxu0 %v421
        %529 = vmatprep.subr.mxu0 %v418
        %530 = vmatpush2.msra.mxu0 %v417
        %531 = vmatprep.subr.mxu0 %v414
        %532 = vmatpush2.msra.mxu0 %v413
        %533 = vmatprep.subr.mxu0 %v410
        %534 = vmatpush2.msra.mxu0 %v409
        %535 = vmatprep.subr.mxu0 %v406
        %536 = vmatpush2.msra.mxu0 %v405
        %537 = vmatprep.subr.mxu0 %v402
        %538 = vmatpush2.msra.mxu0 %v401
        %539 = vmatprep.subr.mxu0 %v398
        %540 = vmatpush2.msra.mxu0 %v397
        %541 = vmatprep.subr.mxu0 %v394
        %542 = vmatpush2.msra.mxu0 %v393
        %543 = vmatprep.mubr.f32.mxu0 %v328
        %544 = vmatmul.mubr.f32.gmra.mxu0 %v327
        %v545 = vpop.f32.mrf.mxu0
        %v546 = vadd.f32 %v462, %v545
        %v547 = vpop.f32.mrf.mxu0
        %v548 = vadd.f32 %v466, %v547
        %549 = vdwg.mxu0
        %550 = vmatprep.subr.mxu0 %v392
        %551 = vmatpush1.msra.mxu0 %v391
        %552 = vmatprep.subr.mxu0 %v388
        %553 = vmatpush1.msra.mxu0 %v387
        %554 = vmatprep.subr.mxu0 %v384
        %555 = vmatpush1.msra.mxu0 %v383
        %556 = vmatprep.subr.mxu0 %v380
        %557 = vmatpush1.msra.mxu0 %v379
        %558 = vmatprep.subr.mxu0 %v376
        %559 = vmatpush1.msra.mxu0 %v375
        %560 = vmatprep.subr.mxu0 %v372
        %561 = vmatpush1.msra.mxu0 %v371
        %562 = vmatprep.subr.mxu0 %v368
        %563 = vmatpush1.msra.mxu0 %v367
        %564 = vmatprep.subr.mxu0 %v364
        %565 = vmatpush1.msra.mxu0 %v363
        %566 = vmatprep.subr.mxu0 %v360
        %567 = vmatpush1.msra.mxu0 %v359
        %568 = vmatprep.subr.mxu0 %v356
        %569 = vmatpush1.msra.mxu0 %v355
        %570 = vmatprep.subr.mxu0 %v352
        %571 = vmatpush1.msra.mxu0 %v351
        %572 = vmatprep.subr.mxu0 %v348
        %573 = vmatpush1.msra.mxu0 %v347
        %574 = vmatprep.subr.mxu0 %v344
        %575 = vmatpush1.msra.mxu0 %v343
        %576 = vmatprep.subr.mxu0 %v340
        %577 = vmatpush1.msra.mxu0 %v339
        %578 = vmatprep.subr.mxu0 %v336
        %579 = vmatpush1.msra.mxu0 %v335
        %580 = vmatprep.subr.mxu0 %v332
        %581 = vmatpush1.msra.mxu0 %v331
        %582 = vmatprep.subr.mxu0 %v456
        %583 = vmatpush2.msra.mxu0 %v455
        %584 = vmatprep.subr.mxu0 %v452
        %585 = vmatpush2.msra.mxu0 %v451
        %586 = vmatprep.subr.mxu0 %v448
        %587 = vmatpush2.msra.mxu0 %v447
        %588 = vmatprep.subr.mxu0 %v444
        %589 = vmatpush2.msra.mxu0 %v443
        %590 = vmatprep.subr.mxu0 %v440
        %591 = vmatpush2.msra.mxu0 %v439
        %592 = vmatprep.subr.mxu0 %v436
        %593 = vmatpush2.msra.mxu0 %v435
        %594 = vmatprep.subr.mxu0 %v432
        %595 = vmatpush2.msra.mxu0 %v431
        %596 = vmatprep.subr.mxu0 %v428
        %597 = vmatpush2.msra.mxu0 %v427
        %598 = vmatprep.subr.mxu0 %v424
        %599 = vmatpush2.msra.mxu0 %v423
        %600 = vmatprep.subr.mxu0 %v420
        %601 = vmatpush2.msra.mxu0 %v419
        %602 = vmatprep.subr.mxu0 %v416
        %603 = vmatpush2.msra.mxu0 %v415
        %604 = vmatprep.subr.mxu0 %v412
        %605 = vmatpush2.msra.mxu0 %v411
        %606 = vmatprep.subr.mxu0 %v408
        %607 = vmatpush2.msra.mxu0 %v407
        %608 = vmatprep.subr.mxu0 %v404
        %609 = vmatpush2.msra.mxu0 %v403
        %610 = vmatprep.subr.mxu0 %v400
        %611 = vmatpush2.msra.mxu0 %v399
        %612 = vmatprep.subr.mxu0 %v396
        %613 = vmatpush2.msra.mxu0 %v395
        %614 = vmatprep.mubr.f32.mxu0 %v328
        %615 = vmatmul.mubr.f32.gmra.mxu0 %v327
        %v616 = vpop.f32.mrf.mxu0
        %v617 = vadd.f32 %v470, %v616
        %v618 = vpop.f32.mrf.mxu0
        %v619 = vadd.f32 %v474, %v618
        %620 = vdwg.mxu0
        %v621 = vxor.u32 %v546, 2147483648
        %v622 = vmul.f32 %v621, 1.442695
        %v623 = vpow.pop %v622
        %v624 = vadd.f32 %v623, 1.0
        %v625 = vrcp.pop %v624
        %v626 = vmul.f32 1.0, %v625
        %v627 = vxor.u32 %v548, 2147483648
        %v628 = vmul.f32 %v627, 1.442695
        %v629 = vpow.pop %v628
        %v630 = vadd.f32 %v629, 1.0
        %v631 = vrcp.pop %v630
        %v632 = vmul.f32 1.0, %v631
        %v633 = vtanh.pop %v617
        %v634 = vxor.u32 %v619, 2147483648
        %v635 = vmul.f32 %v634, 1.442695
        %v636 = vpow.pop %v635
        %v637 = vadd.f32 %v636, 1.0
        %v638 = vrcp.pop %v637
        %v639 = vmul.f32 1.0, %v638
        %v640 = vld [vmem:[#allocation3] sm:$0x3]
        %v641 = vmul.f32 %v632, %v640
        %v642 = vmul.f32 %v626, %v633
        %v643 = vadd.f32 %v641, %v642
        %v644 = vtanh.pop %v643
        %v645 = vmul.f32 %v639, %v644
        %646 = vst [vmem:[#allocation2] sm:$0x3] %v645
        %647 = vst [vmem:[#allocation3] sm:$0x3] %v643
        %648 = vst [vmem:[%s316] sm:$0x3] %v645
        %v649 = vld [vmem:[%s3] sm:$0xff]
        %v650 = vld [vmem:[%s3 + $0x8] sm:$0xff]
        %v651 = vld [vmem:[%s3 + $0x10] sm:$0xff]
        %v652 = vld [vmem:[%s3 + $0x18] sm:$0xff]
        %v653 = vld [vmem:[%s3 + $0x20] sm:$0xff]
        %v654 = vld [vmem:[%s3 + $0x28] sm:$0xff]
        %v655 = vld [vmem:[%s3 + $0x30] sm:$0xff]
        %v656 = vld [vmem:[%s3 + $0x38] sm:$0xff]
        %v657 = vld [vmem:[%s3 + $0x40] sm:$0xff]
        %v658 = vld [vmem:[%s3 + $0x48] sm:$0xff]
        %v659 = vld [vmem:[%s3 + $0x50] sm:$0xff]
        %v660 = vld [vmem:[%s3 + $0x58] sm:$0xff]
        %v661 = vld [vmem:[%s3 + $0x60] sm:$0xff]
        %v662 = vld [vmem:[%s3 + $0x68] sm:$0xff]
        %v663 = vld [vmem:[%s3 + $0x70] sm:$0xff]
        %v664 = vld [vmem:[%s3 + $0x78] sm:$0xff]
        %v665 = vld [vmem:[%s4] sm:$0x1]
        %v667 = vlaneseq
        %v668 = vshrl.u32 %v667, 7
        %v669 = vsub.s32 0, %v668
        %v670 = vrot.slane %v665, %v669
        %672 = vmatprep.subr.mxu0 0.0
        %673 = vmatpush1.msra.mxu0 %v664
        %674 = vmatprep.subr.mxu0 0.0
        %675 = vmatpush1.msra.mxu0 %v663
        %676 = vmatprep.subr.mxu0 0.0
        %677 = vmatpush1.msra.mxu0 %v662
        %678 = vmatprep.subr.mxu0 0.0
        %679 = vmatpush1.msra.mxu0 %v661
        %680 = vmatprep.subr.mxu0 0.0
        %681 = vmatpush1.msra.mxu0 %v660
        %682 = vmatprep.subr.mxu0 0.0
        %683 = vmatpush1.msra.mxu0 %v659
        %684 = vmatprep.subr.mxu0 0.0
        %685 = vmatpush1.msra.mxu0 %v658
        %686 = vmatprep.subr.mxu0 0.0
        %687 = vmatpush1.msra.mxu0 %v657
        %688 = vmatprep.subr.mxu0 0.0
        %689 = vmatpush1.msra.mxu0 %v656
        %690 = vmatprep.subr.mxu0 0.0
        %691 = vmatpush1.msra.mxu0 %v655
        %692 = vmatprep.subr.mxu0 0.0
        %693 = vmatpush1.msra.mxu0 %v654
        %694 = vmatprep.subr.mxu0 0.0
        %695 = vmatpush1.msra.mxu0 %v653
        %696 = vmatprep.subr.mxu0 0.0
        %697 = vmatpush1.msra.mxu0 %v652
        %698 = vmatprep.subr.mxu0 0.0
        %699 = vmatpush1.msra.mxu0 %v651
        %700 = vmatprep.subr.mxu0 0.0
        %701 = vmatpush1.msra.mxu0 %v650
        %702 = vmatprep.subr.mxu0 0.0
        %703 = vmatpush1.msra.mxu0 %v649
        %704 = vmatprep.subr.mxu0 0.0
        %705 = vmatpush2.msra.mxu0 0.0
        %706 = vmatprep.subr.mxu0 0.0
        %707 = vmatpush2.msra.mxu0 0.0
        %708 = vmatprep.subr.mxu0 0.0
        %709 = vmatpush2.msra.mxu0 0.0
        %710 = vmatprep.subr.mxu0 0.0
        %711 = vmatpush2.msra.mxu0 0.0
        %712 = vmatprep.subr.mxu0 0.0
        %713 = vmatpush2.msra.mxu0 0.0
        %714 = vmatprep.subr.mxu0 0.0
        %715 = vmatpush2.msra.mxu0 0.0
        %716 = vmatprep.subr.mxu0 0.0
        %717 = vmatpush2.msra.mxu0 0.0
        %718 = vmatprep.subr.mxu0 0.0
        %719 = vmatpush2.msra.mxu0 0.0
        %720 = vmatprep.subr.mxu0 0.0
        %721 = vmatpush2.msra.mxu0 0.0
        %722 = vmatprep.subr.mxu0 0.0
        %723 = vmatpush2.msra.mxu0 0.0
        %724 = vmatprep.subr.mxu0 0.0
        %725 = vmatpush2.msra.mxu0 0.0
        %726 = vmatprep.subr.mxu0 0.0
        %727 = vmatpush2.msra.mxu0 0.0
        %728 = vmatprep.subr.mxu0 0.0
        %729 = vmatpush2.msra.mxu0 0.0
        %730 = vmatprep.subr.mxu0 0.0
        %731 = vmatpush2.msra.mxu0 0.0
        %732 = vmatprep.subr.mxu0 0.0
        %733 = vmatpush2.msra.mxu0 0.0
        %734 = vmatprep.subr.mxu0 0.0
        %735 = vmatpush2.msra.mxu0 0.0
        %736 = vmatprep.mubr.f32.mxu0 0.0
        %737 = vmatmul.mubr.f32.gmra.mxu0 %v645
        %v738 = vpop.f32.mrf.mxu0
        %v739 = vadd.f32 %v670, %v738
        %v740 = vpop.f32.mrf.mxu0
        %741 = vdwg.mxu0
        %742 = vst [vmem:[%s320] sm:$0x3] %v739
        %743 = vst [vmem:[%s7] sm:$0x3] %v645
        %744 = vst [vmem:[%s8] sm:$0x3] %v643
        %p745 = scmp.lt.s32.totalorder %s21, 7
        %s746 = scalar_select %p745, %s21, 7
        %s747 = smul.addr %s746, 2
        %s748 = scalar_lea.vmem %s5, %s747
        %p749 = scmp.lt.s32.totalorder %s21, 7
        %s750 = scalar_select %p749, %s21, 7
        %s751 = smul.addr %s750, 2
        %s752 = scalar_lea.vmem %s6, %s751
        // Predicated region
        $region49: #{transliteration_forward.2} parent=39 // pred_check
          %p753 = pneg %p149
        $region50: #{transliteration_forward.2} parent=39 // pred_check_branch
          %755 = sbr.rel (%p753) target = $region52
        $region51: #{transliteration_forward.2} parent=39 // pred_region
          _
        $region52: #{transliteration_forward.2} parent=39 // pred_fallthru
          _
        // Predicated region
        $region53: #{transliteration_forward.2} parent=39 // pred_check
          %p756 = pneg %p175
        $region54: #{transliteration_forward.2} parent=39 // pred_check_branch
          %758 = sbr.rel (%p756) target = $region56
        $region55: #{transliteration_forward.2} parent=39 // pred_region
          _
        $region56: #{transliteration_forward.2} parent=39 // pred_fallthru
          _
        // Predicated region
        $region57: #{transliteration_forward.2} parent=39 // pred_check
          %p759 = pneg %p196
        $region58: #{transliteration_forward.2} parent=39 // pred_check_branch
          %761 = sbr.rel (%p759) target = $region60
        $region59: #{transliteration_forward.2} parent=39 // pred_region
          _
        $region60: #{transliteration_forward.2} parent=39 // pred_fallthru
          _
        // Predicated region
        $region61: #{transliteration_forward.2} parent=39 // pred_check
          %p762 = pneg %p217
        $region62: #{transliteration_forward.2} parent=39 // pred_check_branch
          %764 = sbr.rel (%p762) target = $region64
        $region63: #{transliteration_forward.2} parent=39 // pred_region
          _
        $region64: #{transliteration_forward.2} parent=39 // pred_fallthru
          _
        // Predicated region
        $region65: #{transliteration_forward.2} parent=39 // pred_check
          %p765 = pneg %p196
        $region66: #{transliteration_forward.2} parent=39 // pred_check_branch
          %767 = sbr.rel (%p765) target = $region68
        $region67: #{transliteration_forward.2} parent=39 // pred_region
          _
        $region68: #{transliteration_forward.2} parent=39 // pred_fallthru
          _
        // Predicated region
        $region69: #{transliteration_forward.2} parent=39 // pred_check
          %p768 = pneg %p217
        $region70: #{transliteration_forward.2} parent=39 // pred_check_branch
          %770 = sbr.rel (%p768) target = $region72
        $region71: #{transliteration_forward.2} parent=39 // pred_region
          _
        $region72: #{transliteration_forward.2} parent=39 // pred_fallthru
          _
      $region40: #{transliteration_forward.2} parent=5 // pred_fallthru
        _
      %p771 = scmp.le.s32.totalorder 2, %s16
      // Predicated region
      $region73: #{transliteration_forward.2} parent=5 // pred_check
        %p772 = pneg %p771
      $region74: #{transliteration_forward.2} parent=5 // pred_check_branch
        %774 = sbr.rel (%p772) target = $region76
      $region75: #{transliteration_forward.2} parent=5 // pred_region
        %s775 = ssub.s32 %s16, 2
        // Predicated region
        $region77: #{transliteration_forward.2} parent=75 // pred_check
          %p776 = pneg %p155
        $region78: #{transliteration_forward.2} parent=75 // pred_check_branch
          %778 = sbr.rel (%p776) target = $region80
        $region79: #{transliteration_forward.2} parent=75 // pred_region
          %p779 = scmp.lt.s32.totalorder %s22, 7
          %s780 = scalar_select %p779, %s22, 7
          %s781 = smul.addr %s780, 2
          %s782 = scalar_lea.vmem %s5, %s781
        $region80: #{transliteration_forward.2} parent=75 // pred_fallthru
          _
        // Predicated region
        $region81: #{transliteration_forward.2} parent=75 // pred_check
          %p783 = pneg %p181
        $region82: #{transliteration_forward.2} parent=75 // pred_check_branch
          %785 = sbr.rel (%p783) target = $region84
        $region83: #{transliteration_forward.2} parent=75 // pred_region
          %p786 = scmp.lt.s32.totalorder %s22, 7
          %s787 = scalar_select %p786, %s22, 7
          %s788 = smul.addr %s787, 2
          %s789 = scalar_lea.vmem %s6, %s788
        $region84: #{transliteration_forward.2} parent=75 // pred_fallthru
          _
      $region76: #{transliteration_forward.2} parent=5 // pred_fallthru
        _
    $region6: #{transliteration_forward.2} parent=1 // loop_footer
      %s20 = sadd.s32 1, %s16
    $region7: #{transliteration_forward.2} parent=1 // loop_footer_branch
      %15 = sbr.rel target = $region3
    $region8: #{transliteration_forward.2} parent=1 // loop_exit
      _
    %790 = vsyncpa [#allocation5], 1
    %s791 = scalar_lea.sflag [#allocation5], 1
    %792 = vsyncpa %s791, 1

// kernel: transliteration_forward.3
$region0: #{transliteration_forward.3}
  #allocation0 [shape = 'u32[]', space=smem, size = 0x4, offset = 0x4, fixed_abs, tag = 'smem constant byte address 0x4 - core index']
  #allocation1 [shape = 'u32[144,128]{1,0:T(1,128)}', space=vmem, size = 0x12000, scoped, tag = 'internal scratch']
  #allocation2 [shape = 'f32[2,128]{1,0:T(2,128)}', space=vmem, size = 0x400, scoped, tag = 'scratch operand']
  #allocation3 [shape = 'f32[2,128]{1,0:T(2,128)}', space=vmem, size = 0x400, scoped, tag = 'scratch operand']
  %s0 = inlined_call_operand.vmem [shape: f32[7,2,128], index: 0, kind: input, shape index: {}]
  %s1 = inlined_call_operand.vmem [shape: f32[2,8,128], index: 1, kind: input, shape index: {}]
  %s2 = inlined_call_operand.vmem [shape: f32[2,8,128], index: 2, kind: input, shape index: {}]
  %s3 = inlined_call_operand.vmem [shape: f32[2,128], index: 3, kind: input, shape index: {}]
  %s4 = inlined_call_operand.vmem [shape: f32[2,128], index: 4, kind: input, shape index: {}]
  %s5 = inlined_call_operand.hbm [shape: f32[128,128], index: 5, kind: input, shape index: {}]
  %s6 = inlined_call_operand.vmem [shape: f32[1,128], index: 6, kind: input, shape index: {}]
  %s7 = inlined_call_operand.vmem [shape: f32[384,512], index: 7, kind: input, shape index: {}]
  %s8 = inlined_call_operand.vmem [shape: f32[1,512], index: 8, kind: input, shape index: {}]
  %s9 = inlined_call_operand.hbm [shape: f32[128,128], index: 9, kind: input, shape index: {}]
  %s10 = inlined_call_operand.vmem [shape: f32[1,128], index: 10, kind: input, shape index: {}]
  %s11 = inlined_call_operand.vmem [shape: f32[7,2,128], index: 11, kind: output, shape index: {0}]
  %s12 = inlined_call_operand.vmem [shape: f32[7,2,8], index: 12, kind: output, shape index: {1}]
  %13 = xla_tuple %s11, %s12
  %s14 = sld [smem:[#allocation0]]
  $region97: #{transliteration_forward.3} parent=0
    _
  %s16 = ssub.s32 1, %s14
  %s17 = scalar_select 0, %s16, %s14
  $region1: #{transliteration_forward.3} parent=0
    #allocation4 [shape = 'u8[65536]{0}', space=vmem, size = 0x10000, scoped, tag = 'input window, operand 5, single buffered']
    #allocation5 [shape = 's32[2]{0}', space=sflag, size = 0x8, scoped, tag = 'scoped memory for transliteration_forward.3']
    #allocation6 [shape = 'u8[65536]{0}', space=vmem, size = 0x10000, scoped, tag = 'input window, operand 9, single buffered']
    #allocation7 [shape = 's32[1]{0}', space=sflag, size = 0x4, scoped, tag = 'scoped memory for transliteration_forward.3']
    %18 = vsyncpa [#allocation5], 0
    %19 = vsyncpa [#allocation7], 0
    loop: start=0, step=1, limit=9
    $region2: #{transliteration_forward.3} parent=1 // loop_pre_header
      _
    $region3: #{transliteration_forward.3} parent=1 // loop_header
      %s21 = sphi 0, %s25
      %p22 = scmp.ge.s32.totalorder %s21, 9
      %s31 = sphi 0, %s33
      %s34 = sphi 0, %s31
      %s35 = sphi 0, %s34
      %s51 = sphi 0, %s35
      %s55 = sphi 0, %s55
      %s57 = sphi 0, %s55
      %s58 = sphi 0, %s57
      %s72 = sphi 0, %s58
      %s76 = sphi 0, %s76
      %s78 = sphi 0, %s76
      %s79 = sphi 0, %s78
      %s93 = sphi 0, %s79
      %s97 = sphi 0, %s97
      %s99 = sphi 0, %s97
      %s100 = sphi 0, %s99
      %s114 = sphi 0, %s100
      %s118 = sphi 0, %s118
      %s120 = sphi 0, %s118
      %s121 = sphi 0, %s120
      %s135 = sphi 0, %s121
      %s139 = sphi 0, %s139
      %s141 = sphi 0, %s139
      %s142 = sphi 0, %s141
      %s156 = sphi 0, %s142
      %s160 = sphi 0, %s160
      %s162 = sphi 0, %s160
      %s163 = sphi 0, %s162
      %s177 = sphi 0, %s163
      %s181 = sphi 0, %s181
      %s183 = sphi 0, %s181
      %s184 = sphi 0, %s183
      %s198 = sphi 0, %s184
      %s202 = sphi 0, %s202
      %s204 = sphi 0, %s202
      %s205 = sphi 0, %s204
      %s219 = sphi 0, %s205
      %s223 = sphi 0, %s223
      %s225 = sphi 0, %s223
      %s226 = sphi 0, %s225
      %s240 = sphi 0, %s226
      %s244 = sphi 0, %s244
      %s246 = sphi 0, %s244
      %s247 = sphi 0, %s246
      %s261 = sphi 0, %s247
      %s267 = sphi 0, %s269
      %s270 = sphi 0, %s267
      %s271 = sphi 0, %s270
      %s287 = sphi 0, %s271
      %s293 = sphi 0, %s295
      %s296 = sphi 0, %s293
      %s297 = sphi 0, %s296
      %s313 = sphi 0, %s297
    $region4: #{transliteration_forward.3} parent=1 // loop_header_branch
      %24 = sbr.rel (%p22) target = $region8
    $region5: #{transliteration_forward.3} parent=1 // loop_body
      %s26 = ssub.s32 %s21, 1
      %s27 = ssub.s32 %s21, 2
      %s28 = sadd.s32 %s21, 1
      %s29 = ssub.s32 %s21, %s28
      %p30 = scmp.eq.s32.totalorder %s29, 0
      %s32 = sadd.s32 %s31, 1
      %s33 = scalar_select %p30, %s31, %s32
      %p36 = pneg %p30
      %p37 = scmp.eq.s32.totalorder %s21, 6
      %p38 = por %p36, %p37
      %p39 = scmp.ne.s32.totalorder %s31, %s34
      %p40 = scmp.eq.s32.totalorder %s21, 0
      %p41 = por %p39, %p40
      %p42 = scmp.ne.s32.totalorder %s31, %s34
      %p43 = scmp.eq.s32.totalorder %s26, 6
      %p44 = por %p42, %p43
      %p45 = scmp.ne.s32.totalorder %s34, %s35
      %p46 = scmp.eq.s32.totalorder %s26, 0
      %p47 = por %p45, %p46
      %p48 = scmp.ne.s32.totalorder %s34, %s35
      %p49 = scmp.eq.s32.totalorder %s27, 6
      %p50 = por %p48, %p49
      %p52 = scmp.ne.s32.totalorder %s35, %s51
      %p53 = scmp.eq.s32.totalorder %s27, 0
      %p54 = por %p52, %p53
      %s56 = sadd.s32 %s55, 1
      %p59 = scmp.eq.s32.totalorder %s21, 6
      %p60 = scmp.ne.s32.totalorder %s55, %s57
      %p61 = scmp.eq.s32.totalorder %s21, 0
      %p62 = por %p60, %p61
      %p63 = scmp.ne.s32.totalorder %s55, %s57
      %p64 = scmp.eq.s32.totalorder %s26, 6
      %p65 = por %p63, %p64
      %p66 = scmp.ne.s32.totalorder %s57, %s58
      %p67 = scmp.eq.s32.totalorder %s26, 0
      %p68 = por %p66, %p67
      %p69 = scmp.ne.s32.totalorder %s57, %s58
      %p70 = scmp.eq.s32.totalorder %s27, 6
      %p71 = por %p69, %p70
      %p73 = scmp.ne.s32.totalorder %s58, %s72
      %p74 = scmp.eq.s32.totalorder %s27, 0
      %p75 = por %p73, %p74
      %s77 = sadd.s32 %s76, 1
      %p80 = scmp.eq.s32.totalorder %s21, 6
      %p81 = scmp.ne.s32.totalorder %s76, %s78
      %p82 = scmp.eq.s32.totalorder %s21, 0
      %p83 = por %p81, %p82
      %p84 = scmp.ne.s32.totalorder %s76, %s78
      %p85 = scmp.eq.s32.totalorder %s26, 6
      %p86 = por %p84, %p85
      %p87 = scmp.ne.s32.totalorder %s78, %s79
      %p88 = scmp.eq.s32.totalorder %s26, 0
      %p89 = por %p87, %p88
      %p90 = scmp.ne.s32.totalorder %s78, %s79
      %p91 = scmp.eq.s32.totalorder %s27, 6
      %p92 = por %p90, %p91
      %p94 = scmp.ne.s32.totalorder %s79, %s93
      %p95 = scmp.eq.s32.totalorder %s27, 0
      %p96 = por %p94, %p95
      %s98 = sadd.s32 %s97, 1
      %p101 = scmp.eq.s32.totalorder %s21, 6
      %p102 = scmp.ne.s32.totalorder %s97, %s99
      %p103 = scmp.eq.s32.totalorder %s21, 0
      %p104 = por %p102, %p103
      %p105 = scmp.ne.s32.totalorder %s97, %s99
      %p106 = scmp.eq.s32.totalorder %s26, 6
      %p107 = por %p105, %p106
      %p108 = scmp.ne.s32.totalorder %s99, %s100
      %p109 = scmp.eq.s32.totalorder %s26, 0
      %p110 = por %p108, %p109
      %p111 = scmp.ne.s32.totalorder %s99, %s100
      %p112 = scmp.eq.s32.totalorder %s27, 6
      %p113 = por %p111, %p112
      %p115 = scmp.ne.s32.totalorder %s100, %s114
      %p116 = scmp.eq.s32.totalorder %s27, 0
      %p117 = por %p115, %p116
      %s119 = sadd.s32 %s118, 1
      %p122 = scmp.eq.s32.totalorder %s21, 6
      %p123 = scmp.ne.s32.totalorder %s118, %s120
      %p124 = scmp.eq.s32.totalorder %s21, 0
      %p125 = por %p123, %p124
      %p126 = scmp.ne.s32.totalorder %s118, %s120
      %p127 = scmp.eq.s32.totalorder %s26, 6
      %p128 = por %p126, %p127
      %p129 = scmp.ne.s32.totalorder %s120, %s121
      %p130 = scmp.eq.s32.totalorder %s26, 0
      %p131 = por %p129, %p130
      %p132 = scmp.ne.s32.totalorder %s120, %s121
      %p133 = scmp.eq.s32.totalorder %s27, 6
      %p134 = por %p132, %p133
      %p136 = scmp.ne.s32.totalorder %s121, %s135
      %p137 = scmp.eq.s32.totalorder %s27, 0
      %p138 = por %p136, %p137
      %s140 = sadd.s32 %s139, 1
      %p143 = scmp.eq.s32.totalorder %s21, 6
      %p144 = scmp.ne.s32.totalorder %s139, %s141
      %p145 = scmp.eq.s32.totalorder %s21, 0
      %p146 = por %p144, %p145
      %p147 = scmp.ne.s32.totalorder %s139, %s141
      %p148 = scmp.eq.s32.totalorder %s26, 6
      %p149 = por %p147, %p148
      %p150 = scmp.ne.s32.totalorder %s141, %s142
      %p151 = scmp.eq.s32.totalorder %s26, 0
      %p152 = por %p150, %p151
      %p153 = scmp.ne.s32.totalorder %s141, %s142
      %p154 = scmp.eq.s32.totalorder %s27, 6
      %p155 = por %p153, %p154
      %p157 = scmp.ne.s32.totalorder %s142, %s156
      %p158 = scmp.eq.s32.totalorder %s27, 0
      %p159 = por %p157, %p158
      %s161 = sadd.s32 %s160, 1
      %p164 = scmp.eq.s32.totalorder %s21, 6
      %p165 = scmp.ne.s32.totalorder %s160, %s162
      %p166 = scmp.eq.s32.totalorder %s21, 0
      %p167 = por %p165, %p166
      %p168 = scmp.ne.s32.totalorder %s160, %s162
      %p169 = scmp.eq.s32.totalorder %s26, 6
      %p170 = por %p168, %p169
      %p171 = scmp.ne.s32.totalorder %s162, %s163
      %p172 = scmp.eq.s32.totalorder %s26, 0
      %p173 = por %p171, %p172
      %p174 = scmp.ne.s32.totalorder %s162, %s163
      %p175 = scmp.eq.s32.totalorder %s27, 6
      %p176 = por %p174, %p175
      %p178 = scmp.ne.s32.totalorder %s163, %s177
      %p179 = scmp.eq.s32.totalorder %s27, 0
      %p180 = por %p178, %p179
      %s182 = sadd.s32 %s181, 1
      %p185 = scmp.eq.s32.totalorder %s21, 6
      %p186 = scmp.ne.s32.totalorder %s181, %s183
      %p187 = scmp.eq.s32.totalorder %s21, 0
      %p188 = por %p186, %p187
      %p189 = scmp.ne.s32.totalorder %s181, %s183
      %p190 = scmp.eq.s32.totalorder %s26, 6
      %p191 = por %p189, %p190
      %p192 = scmp.ne.s32.totalorder %s183, %s184
      %p193 = scmp.eq.s32.totalorder %s26, 0
      %p194 = por %p192, %p193
      %p195 = scmp.ne.s32.totalorder %s183, %s184
      %p196 = scmp.eq.s32.totalorder %s27, 6
      %p197 = por %p195, %p196
      %p199 = scmp.ne.s32.totalorder %s184, %s198
      %p200 = scmp.eq.s32.totalorder %s27, 0
      %p201 = por %p199, %p200
      %s203 = sadd.s32 %s202, 1
      %p206 = scmp.eq.s32.totalorder %s21, 6
      %p207 = scmp.ne.s32.totalorder %s202, %s204
      %p208 = scmp.eq.s32.totalorder %s21, 0
      %p209 = por %p207, %p208
      %p210 = scmp.ne.s32.totalorder %s202, %s204
      %p211 = scmp.eq.s32.totalorder %s26, 6
      %p212 = por %p210, %p211
      %p213 = scmp.ne.s32.totalorder %s204, %s205
      %p214 = scmp.eq.s32.totalorder %s26, 0
      %p215 = por %p213, %p214
      %p216 = scmp.ne.s32.totalorder %s204, %s205
      %p217 = scmp.eq.s32.totalorder %s27, 6
      %p218 = por %p216, %p217
      %p220 = scmp.ne.s32.totalorder %s205, %s219
      %p221 = scmp.eq.s32.totalorder %s27, 0
      %p222 = por %p220, %p221
      %s224 = sadd.s32 %s223, 1
      %p227 = scmp.eq.s32.totalorder %s21, 6
      %p228 = scmp.ne.s32.totalorder %s223, %s225
      %p229 = scmp.eq.s32.totalorder %s21, 0
      %p230 = por %p228, %p229
      %p231 = scmp.ne.s32.totalorder %s223, %s225
      %p232 = scmp.eq.s32.totalorder %s26, 6
      %p233 = por %p231, %p232
      %p234 = scmp.ne.s32.totalorder %s225, %s226
      %p235 = scmp.eq.s32.totalorder %s26, 0
      %p236 = por %p234, %p235
      %p237 = scmp.ne.s32.totalorder %s225, %s226
      %p238 = scmp.eq.s32.totalorder %s27, 6
      %p239 = por %p237, %p238
      %p241 = scmp.ne.s32.totalorder %s226, %s240
      %p242 = scmp.eq.s32.totalorder %s27, 0
      %p243 = por %p241, %p242
      %s245 = sadd.s32 %s244, 1
      %p248 = scmp.eq.s32.totalorder %s21, 6
      %p249 = scmp.ne.s32.totalorder %s244, %s246
      %p250 = scmp.eq.s32.totalorder %s21, 0
      %p251 = por %p249, %p250
      %p252 = scmp.ne.s32.totalorder %s244, %s246
      %p253 = scmp.eq.s32.totalorder %s26, 6
      %p254 = por %p252, %p253
      %p255 = scmp.ne.s32.totalorder %s246, %s247
      %p256 = scmp.eq.s32.totalorder %s26, 0
      %p257 = por %p255, %p256
      %p258 = scmp.ne.s32.totalorder %s246, %s247
      %p259 = scmp.eq.s32.totalorder %s27, 6
      %p260 = por %p258, %p259
      %p262 = scmp.ne.s32.totalorder %s247, %s261
      %p263 = scmp.eq.s32.totalorder %s27, 0
      %p264 = por %p262, %p263
      %s265 = ssub.s32 %s21, %s28
      %p266 = scmp.eq.s32.totalorder %s265, 0
      %s268 = sadd.s32 %s267, 1
      %s269 = scalar_select %p266, %s267, %s268
      %p272 = pneg %p266
      %p273 = scmp.eq.s32.totalorder %s21, 6
      %p274 = por %p272, %p273
      %p275 = scmp.ne.s32.totalorder %s267, %s270
      %p276 = scmp.eq.s32.totalorder %s21, 0
      %p277 = por %p275, %p276
      %p278 = scmp.ne.s32.totalorder %s267, %s270
      %p279 = scmp.eq.s32.totalorder %s26, 6
      %p280 = por %p278, %p279
      %p281 = scmp.ne.s32.totalorder %s270, %s271
      %p282 = scmp.eq.s32.totalorder %s26, 0
      %p283 = por %p281, %p282
      %p284 = scmp.ne.s32.totalorder %s270, %s271
      %p285 = scmp.eq.s32.totalorder %s27, 6
      %p286 = por %p284, %p285
      %p288 = scmp.ne.s32.totalorder %s271, %s287
      %p289 = scmp.eq.s32.totalorder %s27, 0
      %p290 = por %p288, %p289
      %s291 = ssub.s32 %s21, %s28
      %p292 = scmp.eq.s32.totalorder %s291, 0
      %s294 = sadd.s32 %s293, 1
      %s295 = scalar_select %p292, %s293, %s294
      %p298 = pneg %p292
      %p299 = scmp.eq.s32.totalorder %s21, 6
      %p300 = por %p298, %p299
      %p301 = scmp.ne.s32.totalorder %s293, %s296
      %p302 = scmp.eq.s32.totalorder %s21, 0
      %p303 = por %p301, %p302
      %p304 = scmp.ne.s32.totalorder %s293, %s296
      %p305 = scmp.eq.s32.totalorder %s26, 6
      %p306 = por %p304, %p305
      %p307 = scmp.ne.s32.totalorder %s296, %s297
      %p308 = scmp.eq.s32.totalorder %s26, 0
      %p309 = por %p307, %p308
      %p310 = scmp.ne.s32.totalorder %s296, %s297
      %p311 = scmp.eq.s32.totalorder %s27, 6
      %p312 = por %p310, %p311
      %p314 = scmp.ne.s32.totalorder %s297, %s313
      %p315 = scmp.eq.s32.totalorder %s27, 0
      %p316 = por %p314, %p315
      %p317 = scmp.le.s32.totalorder 1, %s21
      %p318 = scmp.lt.s32.totalorder %s21, 8
      %p319 = pnand %p317, %p318
      %p320 = pneg %p319
      // Predicated region
      $region9: #{transliteration_forward.3} parent=5 // pred_check
        _
      $region10: #{transliteration_forward.3} parent=5 // pred_check_branch
        %322 = sbr.rel (%p319) target = $region12
      $region11: #{transliteration_forward.3} parent=5 // pred_region
        %s323 = ssub.s32 %s21, 1
        // Predicated region
        $region13: #{transliteration_forward.3} parent=11 // pred_check
          %p324 = pneg %p68
        $region14: #{transliteration_forward.3} parent=11 // pred_check_branch
          %326 = sbr.rel (%p324) target = $region16
        $region15: #{transliteration_forward.3} parent=11 // pred_region
          _
        $region16: #{transliteration_forward.3} parent=11 // pred_fallthru
          _
        // Predicated region
        $region17: #{transliteration_forward.3} parent=11 // pred_check
          %p327 = pneg %p89
        $region18: #{transliteration_forward.3} parent=11 // pred_check_branch
          %329 = sbr.rel (%p327) target = $region20
        $region19: #{transliteration_forward.3} parent=11 // pred_region
          _
        $region20: #{transliteration_forward.3} parent=11 // pred_fallthru
          _
        // Predicated region
        $region21: #{transliteration_forward.3} parent=11 // pred_check
          %p330 = pneg %p110
        $region22: #{transliteration_forward.3} parent=11 // pred_check_branch
          %332 = sbr.rel (%p330) target = $region24
        $region23: #{transliteration_forward.3} parent=11 // pred_region
          _
        $region24: #{transliteration_forward.3} parent=11 // pred_fallthru
          _
        // Predicated region
        $region25: #{transliteration_forward.3} parent=11 // pred_check
          %p333 = pneg %p131
        $region26: #{transliteration_forward.3} parent=11 // pred_check_branch
          %335 = sbr.rel (%p333) target = $region28
        $region27: #{transliteration_forward.3} parent=11 // pred_region
          _
        $region28: #{transliteration_forward.3} parent=11 // pred_fallthru
          _
        // Predicated region
        $region29: #{transliteration_forward.3} parent=11 // pred_check
          %p336 = pneg %p152
        $region30: #{transliteration_forward.3} parent=11 // pred_check_branch
          %338 = sbr.rel (%p336) target = $region32
        $region31: #{transliteration_forward.3} parent=11 // pred_region
          %s340 = ssub.s32 2048, 2048
          %341 = vsyncadd [#allocation5], %s340
          %s342 = sshll.u32 [#allocation4], 4
          %s343 = int_to_ptr.vmem [resolvable:$true] %s342
          %348 = dma.hbm_to_vmem [thread:$0]  %s5, 2048, %s343, [#allocation5], 128, 128, 8
        $region32: #{transliteration_forward.3} parent=11 // pred_fallthru
          _
        // Predicated region
        $region33: #{transliteration_forward.3} parent=11 // pred_check
          %p349 = pneg %p173
        $region34: #{transliteration_forward.3} parent=11 // pred_check_branch
          %351 = sbr.rel (%p349) target = $region36
        $region35: #{transliteration_forward.3} parent=11 // pred_region
          _
        $region36: #{transliteration_forward.3} parent=11 // pred_fallthru
          _
        // Predicated region
        $region37: #{transliteration_forward.3} parent=11 // pred_check
          %p352 = pneg %p194
        $region38: #{transliteration_forward.3} parent=11 // pred_check_branch
          %354 = sbr.rel (%p352) target = $region40
        $region39: #{transliteration_forward.3} parent=11 // pred_region
          _
        $region40: #{transliteration_forward.3} parent=11 // pred_fallthru
          _
        // Predicated region
        $region41: #{transliteration_forward.3} parent=11 // pred_check
          %p355 = pneg %p215
        $region42: #{transliteration_forward.3} parent=11 // pred_check_branch
          %357 = sbr.rel (%p355) target = $region44
        $region43: #{transliteration_forward.3} parent=11 // pred_region
          _
        $region44: #{transliteration_forward.3} parent=11 // pred_fallthru
          _
        // Predicated region
        $region45: #{transliteration_forward.3} parent=11 // pred_check
          %p358 = pneg %p236
        $region46: #{transliteration_forward.3} parent=11 // pred_check_branch
          %360 = sbr.rel (%p358) target = $region48
        $region47: #{transliteration_forward.3} parent=11 // pred_region
          %s362 = ssub.s32 2048, 2048
          %363 = vsyncadd [#allocation7], %s362
          %s364 = sshll.u32 [#allocation6], 4
          %s365 = int_to_ptr.vmem [resolvable:$true] %s364
          %370 = dma.hbm_to_vmem [thread:$0]  %s9, 2048, %s365, [#allocation7], 128, 128, 8
        $region48: #{transliteration_forward.3} parent=11 // pred_fallthru
          _
        // Predicated region
        $region49: #{transliteration_forward.3} parent=11 // pred_check
          %p371 = pneg %p257
        $region50: #{transliteration_forward.3} parent=11 // pred_check_branch
          %373 = sbr.rel (%p371) target = $region52
        $region51: #{transliteration_forward.3} parent=11 // pred_region
          _
        $region52: #{transliteration_forward.3} parent=11 // pred_fallthru
          _
      $region12: #{transliteration_forward.3} parent=5 // pred_fallthru
        _
      %p374 = scmp.lt.s32.totalorder %s21, 7
      // Predicated region
      $region53: #{transliteration_forward.3} parent=5 // pred_check
        %p375 = pneg %p374
      $region54: #{transliteration_forward.3} parent=5 // pred_check_branch
        %377 = sbr.rel (%p375) target = $region56
      $region55: #{transliteration_forward.3} parent=5 // pred_region
        // Predicated region
        $region57: #{transliteration_forward.3} parent=55 // pred_check
          %p378 = pneg %p41
        $region58: #{transliteration_forward.3} parent=55 // pred_check_branch
          %380 = sbr.rel (%p378) target = $region60
        $region59: #{transliteration_forward.3} parent=55 // pred_region
          %p381 = scmp.lt.s32.totalorder %s21, 6
          %s382 = scalar_select %p381, %s21, 6
          %s383 = smul.addr %s382, 2
          %s384 = scalar_lea.vmem %s0, %s383
        $region60: #{transliteration_forward.3} parent=55 // pred_fallthru
          _
      $region56: #{transliteration_forward.3} parent=5 // pred_fallthru
        _
      %p385 = scmp.le.s32.totalorder 1, %s21
      %p386 = scmp.lt.s32.totalorder %s21, 8
      %p387 = pnand %p385, %p386
      %p388 = pneg %p387
      // Predicated region
      $region61: #{transliteration_forward.3} parent=5 // pred_check
        _
      $region62: #{transliteration_forward.3} parent=5 // pred_check_branch
        %390 = sbr.rel (%p387) target = $region64
      $region63: #{transliteration_forward.3} parent=5 // pred_region
        %s391 = ssub.s32 %s21, 1
        // Predicated region
        $region65: #{transliteration_forward.3} parent=63 // pred_check
          %p392 = pneg %p152
        $region66: #{transliteration_forward.3} parent=63 // pred_check_branch
          %394 = sbr.rel (%p392) target = $region68
        $region67: #{transliteration_forward.3} parent=63 // pred_region
          %395 = dma.done [#allocation5], 2048
        $region68: #{transliteration_forward.3} parent=63 // pred_fallthru
          _
        // Predicated region
        $region69: #{transliteration_forward.3} parent=63 // pred_check
          %p396 = pneg %p236
        $region70: #{transliteration_forward.3} parent=63 // pred_check_branch
          %398 = sbr.rel (%p396) target = $region72
        $region71: #{transliteration_forward.3} parent=63 // pred_region
          %399 = dma.done [#allocation7], 2048
        $region72: #{transliteration_forward.3} parent=63 // pred_fallthru
          _
        %p400 = scmp.lt.s32.totalorder %s26, 6
        %s401 = scalar_select %p400, %s26, 6
        %s402 = smul.addr %s401, 2
        %s403 = scalar_lea.vmem %s0, %s402
        %p404 = pneg %p47
        %p405 = pneg %p44
        %p406 = pneg %p68
        %p407 = pneg %p65
        %p408 = pneg %p89
        %p409 = pneg %p86
        %p410 = pneg %p110
        %p411 = pneg %p107
        %p412 = pneg %p131
        %p413 = pneg %p128
        %p414 = pneg %p152
        %p415 = pneg %p149
        %p416 = pneg %p173
        %p417 = pneg %p170
        %p418 = pneg %p194
        %p419 = pneg %p191
        %p420 = pneg %p215
        %p421 = pneg %p212
        %p422 = pneg %p236
        %p423 = pneg %p233
        %p424 = pneg %p257
        %p425 = pneg %p254
        %p426 = pneg %p283
        %p427 = pneg %p280
        %p428 = scmp.lt.s32.totalorder %s26, 6
        %s429 = scalar_select %p428, %s26, 6
        %s430 = smul.addr %s429, 2
        %s431 = scalar_lea.vmem %s11, %s430
        %p432 = pneg %p309
        %p433 = pneg %p306
        %p434 = scmp.lt.s32.totalorder %s26, 6
        %s435 = scalar_select %p434, %s26, 6
        %s436 = smul.addr %s435, 2
        %s437 = scalar_lea.vmem %s12, %s436
        %p438 = scmp.lt.s32.totalorder %s26, 6
        %s439 = scalar_select %p438, %s26, 6
        %s440 = smul.addr %s439, 2
        %s441 = scalar_lea.vmem %s0, %s440
        %p442 = scmp.lt.s32.totalorder %s26, 6
        %s443 = scalar_select %p442, %s26, 6
        %s444 = smul.addr %s443, 2
        %s445 = scalar_lea.vmem %s11, %s444
        %p446 = scmp.lt.s32.totalorder %s26, 6
        %s447 = scalar_select %p446, %s26, 6
        %s448 = smul.addr %s447, 2
        %s449 = scalar_lea.vmem %s12, %s448
        %p450 = scmp.eq.s32.totalorder %s26, 0
        // Predicated region
        $region73: #{transliteration_forward.3} parent=63 // pred_check
          %p451 = pneg %p450
        $region74: #{transliteration_forward.3} parent=63 // pred_check_branch
          %453 = sbr.rel (%p451) target = $region76
        $region75: #{transliteration_forward.3} parent=63 // pred_region
          %v454 = vld [vmem:[%s3] sm:$0x3]
          %455 = vst [vmem:[#allocation2] sm:$0x3] %v454
          %v456 = vld [vmem:[%s4] sm:$0x3]
          %457 = vst [vmem:[#allocation3] sm:$0x3] %v456
        $region76: #{transliteration_forward.3} parent=63 // pred_fallthru
          _
        %v458 = vld [vmem:[#allocation2] sm:$0x3]
        %v459 = vld [vmem:[#allocation4] sm:$0xff]
        %v460 = vld [vmem:[#allocation4 + $0x8] sm:$0xff]
        %v461 = vld [vmem:[#allocation4 + $0x10] sm:$0xff]
        %v462 = vld [vmem:[#allocation4 + $0x18] sm:$0xff]
        %v463 = vld [vmem:[#allocation4 + $0x20] sm:$0xff]
        %v464 = vld [vmem:[#allocation4 + $0x28] sm:$0xff]
        %v465 = vld [vmem:[#allocation4 + $0x30] sm:$0xff]
        %v466 = vld [vmem:[#allocation4 + $0x38] sm:$0xff]
        %v467 = vld [vmem:[#allocation4 + $0x40] sm:$0xff]
        %v468 = vld [vmem:[#allocation4 + $0x48] sm:$0xff]
        %v469 = vld [vmem:[#allocation4 + $0x50] sm:$0xff]
        %v470 = vld [vmem:[#allocation4 + $0x58] sm:$0xff]
        %v471 = vld [vmem:[#allocation4 + $0x60] sm:$0xff]
        %v472 = vld [vmem:[#allocation4 + $0x68] sm:$0xff]
        %v473 = vld [vmem:[#allocation4 + $0x70] sm:$0xff]
        %v474 = vld [vmem:[#allocation4 + $0x78] sm:$0xff]
        %475 = vmatprep.subr.mxu0 0.0
        %476 = vmatpush1.msra.mxu0 %v474
        %477 = vmatprep.subr.mxu0 0.0
        %478 = vmatpush1.msra.mxu0 %v473
        %479 = vmatprep.subr.mxu0 0.0
        %480 = vmatpush1.msra.mxu0 %v472
        %481 = vmatprep.subr.mxu0 0.0
        %482 = vmatpush1.msra.mxu0 %v471
        %483 = vmatprep.subr.mxu0 0.0
        %484 = vmatpush1.msra.mxu0 %v470
        %485 = vmatprep.subr.mxu0 0.0
        %486 = vmatpush1.msra.mxu0 %v469
        %487 = vmatprep.subr.mxu0 0.0
        %488 = vmatpush1.msra.mxu0 %v468
        %489 = vmatprep.subr.mxu0 0.0
        %490 = vmatpush1.msra.mxu0 %v467
        %491 = vmatprep.subr.mxu0 0.0
        %492 = vmatpush1.msra.mxu0 %v466
        %493 = vmatprep.subr.mxu0 0.0
        %494 = vmatpush1.msra.mxu0 %v465
        %495 = vmatprep.subr.mxu0 0.0
        %496 = vmatpush1.msra.mxu0 %v464
        %497 = vmatprep.subr.mxu0 0.0
        %498 = vmatpush1.msra.mxu0 %v463
        %499 = vmatprep.subr.mxu0 0.0
        %500 = vmatpush1.msra.mxu0 %v462
        %501 = vmatprep.subr.mxu0 0.0
        %502 = vmatpush1.msra.mxu0 %v461
        %503 = vmatprep.subr.mxu0 0.0
        %504 = vmatpush1.msra.mxu0 %v460
        %505 = vmatprep.subr.mxu0 0.0
        %506 = vmatpush1.msra.mxu0 %v459
        %507 = vmatprep.subr.mxu0 0.0
        %508 = vmatpush2.msra.mxu0 0.0
        %509 = vmatprep.subr.mxu0 0.0
        %510 = vmatpush2.msra.mxu0 0.0
        %511 = vmatprep.subr.mxu0 0.0
        %512 = vmatpush2.msra.mxu0 0.0
        %513 = vmatprep.subr.mxu0 0.0
        %514 = vmatpush2.msra.mxu0 0.0
        %515 = vmatprep.subr.mxu0 0.0
        %516 = vmatpush2.msra.mxu0 0.0
        %517 = vmatprep.subr.mxu0 0.0
        %518 = vmatpush2.msra.mxu0 0.0
        %519 = vmatprep.subr.mxu0 0.0
        %520 = vmatpush2.msra.mxu0 0.0
        %521 = vmatprep.subr.mxu0 0.0
        %522 = vmatpush2.msra.mxu0 0.0
        %523 = vmatprep.subr.mxu0 0.0
        %524 = vmatpush2.msra.mxu0 0.0
        %525 = vmatprep.subr.mxu0 0.0
        %526 = vmatpush2.msra.mxu0 0.0
        %527 = vmatprep.subr.mxu0 0.0
        %528 = vmatpush2.msra.mxu0 0.0
        %529 = vmatprep.subr.mxu0 0.0
        %530 = vmatpush2.msra.mxu0 0.0
        %531 = vmatprep.subr.mxu0 0.0
        %532 = vmatpush2.msra.mxu0 0.0
        %533 = vmatprep.subr.mxu0 0.0
        %534 = vmatpush2.msra.mxu0 0.0
        %535 = vmatprep.subr.mxu0 0.0
        %536 = vmatpush2.msra.mxu0 0.0
        %537 = vmatprep.subr.mxu0 0.0
        %538 = vmatpush2.msra.mxu0 0.0
        %539 = vmatprep.mubr.f32.mxu0 0.0
        %540 = vmatmul.mubr.f32.gmra.mxu0 %v458
        %v541 = vpop.f32.mrf.mxu0
        %v542 = vadd.f32 0.0, %v541
        %v543 = vpop.f32.mrf.mxu0
        %544 = vdwg.mxu0
        %v547 = vunpack.c.l.s4 1966171168
        %v548 = vunpack.c.0.s8 %v547
        %v549 = vlaneseq
        %v550 = vshrl.u32 %v549, 7
        %v551 = vsub.s32 %v548, %v550
        %v552 = vrot.slane %v542, %v551
        %v553 = vcombine.high %v552, %v552
        %v555 = vunpack.c.l.s4 1966171168
        %v556 = vunpack.c.0.s8 %v555
        %v557 = vlaneseq
        %v558 = vshrl.u32 %v557, 7
        %v559 = vsub.s32 %v556, %v558
        %v560 = vrot.slane %v552, %v559
        %v562 = vunpack.c.l.s4 1966171168
        %v563 = vunpack.c.0.s8 %v562
        %v564 = vlaneseq
        %v565 = vshrl.u32 %v564, 7
        %v566 = vsub.s32 %v563, %v565
        %v567 = vrot.slane %v553, %v566
        %v568 = vld [vmem:[%s2] sm:$0xff]
        %v569 = vld [vmem:[%s2 + $0x8] sm:$0xff]
        %v570 = vlaneseq
        %v571 = vshrl.u32 %v570, 7
        %v572 = vsub.s32 0, %v571
        %v573 = vrot.slane %v560, %v572
        %v574 = vlaneseq
        %v575 = vshrl.u32 %v574, 7
        %v576 = vsub.s32 0, %v575
        %v577 = vrot.slane %v567, %v576
        %v580 = vadd.f32 %v573, %v568
        %v581 = vadd.f32 %v577, %v569
        %v582 = vtanh.pop %v580
        %v583 = vtanh.pop %v581
        %v584 = vld [vmem:[%s6] sm:$0x1]
        %v586 = vlaneseq
        %v587 = vshrl.u32 %v586, 7
        %v588 = vsub.s32 0, %v587
        %v589 = vrot.slane %v584, %v588
        %v591 = vmul.f32 %v582, %v589
        %v592 = vmul.f32 %v583, %v589
        %593 = vadd.xlane.f32.xlu0 %v591
        %v594 = vpop.xlane.xlu0 %593
        %595 = vadd.xlane.f32.xlu0 %v592
        %v596 = vpop.xlane.xlu0 %595
        %v599 = vlaneseq
        %v600 = vand.u32 %v599, 127
        %v601 = vlaneseq
        %v602 = vshrl.u32 %v601, 7
        %v603 = vsub.s32 %v600, %v602
        %v604 = vrot.slane %v594, %v603
        %v605 = vlaneseq
        %v606 = vshrl.u32 %v605, 7
        %v607 = vsub.s32 %v600, %v606
        %v608 = vrot.slane %v596, %v607
        %vm609 = vcmask 1041409
        %v610 = vsel %vm609, %v608, %v604
        %vm612 = vcmask 58368
        %v613 = vsel %vm612, %v610, -inf
        %614 = vmax.xlane.f32.xlu0 %v613
        %v615 = vpop.xlane.xlu0 %614
        %v617 = vlaneseq
        %v618 = vshrl.u32 %v617, 7
        %v619 = vsub.s32 0, %v618
        %v620 = vrot.slane %v615, %v619
        %v621 = vlaneseq
        %v622 = vshrl.u32 %v621, 7
        %v623 = vsub.s32 1, %v622
        %v624 = vrot.slane %v615, %v623
        %v627 = vsub.f32 %v594, %v620
        %v628 = vsub.f32 %v596, %v624
        %v629 = vmul.f32 %v627, 1.442695
        %v630 = vpow.pop %v629
        %v631 = vmul.f32 %v628, 1.442695
        %v632 = vpow.pop %v631
        %635 = vset.pattern.permute.xlu0 0
        %636 = vperm.xlu0 %635, %v630
        %v637 = vpop.permute.xlu0 %636
        %638 = vset.pattern.permute.xlu0 0
        %639 = vperm.xlu0 %638, %v632
        %v640 = vpop.permute.xlu0 %639
        %v641 = vlaneseq
        %v642 = vshrl.u32 %v641, 7
        %v643 = vsub.s32 %v600, %v642
        %v644 = vrot.slane %v637, %v643
        %v645 = vlaneseq
        %v646 = vshrl.u32 %v645, 7
        %v647 = vsub.s32 %v600, %v646
        %v648 = vrot.slane %v640, %v647
        %v649 = vsel %vm609, %v648, %v644
        %v651 = vsel %vm612, %v649, 0.0
        %652 = vadd.xlane.f32.xlu0 %v651
        %v653 = vpop.xlane.xlu0 %652
        %v655 = vlaneseq
        %v656 = vshrl.u32 %v655, 7
        %v657 = vsub.s32 0, %v656
        %v658 = vrot.slane %v653, %v657
        %v659 = vlaneseq
        %v660 = vshrl.u32 %v659, 7
        %v661 = vsub.s32 1, %v660
        %v662 = vrot.slane %v653, %v661
        %v665 = vrcp.pop %v658
        %v666 = vmul.f32 %v630, %v665
        %v667 = vrcp.pop %v662
        %v668 = vmul.f32 %v632, %v667
        %671 = vset.pattern.permute.xlu0 0
        %672 = vperm.xlu0 %671, %v666
        %v673 = vpop.permute.xlu0 %672
        %674 = vset.pattern.permute.xlu0 0
        %675 = vperm.xlu0 %674, %v668
        %v676 = vpop.permute.xlu0 %675
        %v677 = vlaneseq
        %v678 = vshrl.u32 %v677, 7
        %v679 = vsub.s32 %v600, %v678
        %v680 = vrot.slane %v673, %v679
        %v681 = vlaneseq
        %v682 = vshrl.u32 %v681, 7
        %v683 = vsub.s32 %v600, %v682
        %v684 = vrot.slane %v676, %v683
        %v685 = vsel %vm609, %v684, %v680
        %687 = vst.msk [vmem:[%s449] sm:$0x3] %vm612, %v685
        %v688 = vld [vmem:[%s1] sm:$0xff]
        %v689 = vld [vmem:[%s1 + $0x8] sm:$0xff]
        %v692 = vmul.f32 %v673, %v688
        %v693 = vmul.f32 %v676, %v689
        %v694 = vrot.slane %v692, 4
        %v695 = vadd.f32 %v692, %v694
        %v696 = vrot.slane %v695, 2
        %v697 = vadd.f32 %v695, %v696
        %v698 = vrot.slane %v697, 1
        %v699 = vadd.f32 %v697, %v698
        %v700 = vrot.slane %v693, 4
        %v701 = vadd.f32 %v693, %v700
        %v702 = vrot.slane %v701, 2
        %v703 = vadd.f32 %v701, %v702
        %v704 = vrot.slane %v703, 1
        %v705 = vadd.f32 %v703, %v704
        %v706 = vld [vmem:[%s441] sm:$0x3]
        %v709 = vsel %vm609, %v705, %v699
        %v711 = vld [vmem:[%s7] sm:$0xff]
        %v712 = vld [vmem:[%s7 + $0x8] sm:$0xff]
        %v713 = vld [vmem:[%s7 + $0x10] sm:$0xff]
        %v714 = vld [vmem:[%s7 + $0x18] sm:$0xff]
        %v715 = vld [vmem:[%s7 + $0x20] sm:$0xff]
        %v716 = vld [vmem:[%s7 + $0x28] sm:$0xff]
        %v717 = vld [vmem:[%s7 + $0x30] sm:$0xff]
        %v718 = vld [vmem:[%s7 + $0x38] sm:$0xff]
        %v719 = vld [vmem:[%s7 + $0x40] sm:$0xff]
        %v720 = vld [vmem:[%s7 + $0x48] sm:$0xff]
        %v721 = vld [vmem:[%s7 + $0x50] sm:$0xff]
        %v722 = vld [vmem:[%s7 + $0x58] sm:$0xff]
        %v723 = vld [vmem:[%s7 + $0x60] sm:$0xff]
        %v724 = vld [vmem:[%s7 + $0x68] sm:$0xff]
        %v725 = vld [vmem:[%s7 + $0x70] sm:$0xff]
        %v726 = vld [vmem:[%s7 + $0x78] sm:$0xff]
        %v727 = vld [vmem:[%s7 + $0x80] sm:$0xff]
        %v728 = vld [vmem:[%s7 + $0x88] sm:$0xff]
        %v729 = vld [vmem:[%s7 + $0x90] sm:$0xff]
        %v730 = vld [vmem:[%s7 + $0x98] sm:$0xff]
        %v731 = vld [vmem:[%s7 + $0xa0] sm:$0xff]
        %v732 = vld [vmem:[%s7 + $0xa8] sm:$0xff]
        %v733 = vld [vmem:[%s7 + $0xb0] sm:$0xff]
        %v734 = vld [vmem:[%s7 + $0xb8] sm:$0xff]
        %v735 = vld [vmem:[%s7 + $0xc0] sm:$0xff]
        %v736 = vld [vmem:[%s7 + $0xc8] sm:$0xff]
        %v737 = vld [vmem:[%s7 + $0xd0] sm:$0xff]
        %v738 = vld [vmem:[%s7 + $0xd8] sm:$0xff]
        %v739 = vld [vmem:[%s7 + $0xe0] sm:$0xff]
        %v740 = vld [vmem:[%s7 + $0xe8] sm:$0xff]
        %v741 = vld [vmem:[%s7 + $0xf0] sm:$0xff]
        %v742 = vld [vmem:[%s7 + $0xf8] sm:$0xff]
        %v743 = vld [vmem:[%s7 + $0x100] sm:$0xff]
        %v744 = vld [vmem:[%s7 + $0x108] sm:$0xff]
        %v745 = vld [vmem:[%s7 + $0x110] sm:$0xff]
        %v746 = vld [vmem:[%s7 + $0x118] sm:$0xff]
        %v747 = vld [vmem:[%s7 + $0x120] sm:$0xff]
        %v748 = vld [vmem:[%s7 + $0x128] sm:$0xff]
        %v749 = vld [vmem:[%s7 + $0x130] sm:$0xff]
        %v750 = vld [vmem:[%s7 + $0x138] sm:$0xff]
        %v751 = vld [vmem:[%s7 + $0x140] sm:$0xff]
        %v752 = vld [vmem:[%s7 + $0x148] sm:$0xff]
        %v753 = vld [vmem:[%s7 + $0x150] sm:$0xff]
        %v754 = vld [vmem:[%s7 + $0x158] sm:$0xff]
        %v755 = vld [vmem:[%s7 + $0x160] sm:$0xff]
        %v756 = vld [vmem:[%s7 + $0x168] sm:$0xff]
        %v757 = vld [vmem:[%s7 + $0x170] sm:$0xff]
        %v758 = vld [vmem:[%s7 + $0x178] sm:$0xff]
        %v759 = vld [vmem:[%s7 + $0x180] sm:$0xff]
        %v760 = vld [vmem:[%s7 + $0x188] sm:$0xff]
        %v761 = vld [vmem:[%s7 + $0x190] sm:$0xff]
        %v762 = vld [vmem:[%s7 + $0x198] sm:$0xff]
        %v763 = vld [vmem:[%s7 + $0x1a0] sm:$0xff]
        %v764 = vld [vmem:[%s7 + $0x1a8] sm:$0xff]
        %v765 = vld [vmem:[%s7 + $0x1b0] sm:$0xff]
        %v766 = vld [vmem:[%s7 + $0x1b8] sm:$0xff]
        %v767 = vld [vmem:[%s7 + $0x1c0] sm:$0xff]
        %v768 = vld [vmem:[%s7 + $0x1c8] sm:$0xff]
        %v769 = vld [vmem:[%s7 + $0x1d0] sm:$0xff]
        %v770 = vld [vmem:[%s7 + $0x1d8] sm:$0xff]
        %v771 = vld [vmem:[%s7 + $0x1e0] sm:$0xff]
        %v772 = vld [vmem:[%s7 + $0x1e8] sm:$0xff]
        %v773 = vld [vmem:[%s7 + $0x1f0] sm:$0xff]
        %v774 = vld [vmem:[%s7 + $0x1f8] sm:$0xff]
        %v775 = vld [vmem:[%s7 + $0x200] sm:$0xff]
        %v776 = vld [vmem:[%s7 + $0x208] sm:$0xff]
        %v777 = vld [vmem:[%s7 + $0x210] sm:$0xff]
        %v778 = vld [vmem:[%s7 + $0x218] sm:$0xff]
        %v779 = vld [vmem:[%s7 + $0x220] sm:$0xff]
        %v780 = vld [vmem:[%s7 + $0x228] sm:$0xff]
        %v781 = vld [vmem:[%s7 + $0x230] sm:$0xff]
        %v782 = vld [vmem:[%s7 + $0x238] sm:$0xff]
        %v783 = vld [vmem:[%s7 + $0x240] sm:$0xff]
        %v784 = vld [vmem:[%s7 + $0x248] sm:$0xff]
        %v785 = vld [vmem:[%s7 + $0x250] sm:$0xff]
        %v786 = vld [vmem:[%s7 + $0x258] sm:$0xff]
        %v787 = vld [vmem:[%s7 + $0x260] sm:$0xff]
        %v788 = vld [vmem:[%s7 + $0x268] sm:$0xff]
        %v789 = vld [vmem:[%s7 + $0x270] sm:$0xff]
        %v790 = vld [vmem:[%s7 + $0x278] sm:$0xff]
        %v791 = vld [vmem:[%s7 + $0x280] sm:$0xff]
        %v792 = vld [vmem:[%s7 + $0x288] sm:$0xff]
        %v793 = vld [vmem:[%s7 + $0x290] sm:$0xff]
        %v794 = vld [vmem:[%s7 + $0x298] sm:$0xff]
        %v795 = vld [vmem:[%s7 + $0x2a0] sm:$0xff]
        %v796 = vld [vmem:[%s7 + $0x2a8] sm:$0xff]
        %v797 = vld [vmem:[%s7 + $0x2b0] sm:$0xff]
        %v798 = vld [vmem:[%s7 + $0x2b8] sm:$0xff]
        %v799 = vld [vmem:[%s7 + $0x2c0] sm:$0xff]
        %v800 = vld [vmem:[%s7 + $0x2c8] sm:$0xff]
        %v801 = vld [vmem:[%s7 + $0x2d0] sm:$0xff]
        %v802 = vld [vmem:[%s7 + $0x2d8] sm:$0xff]
        %v803 = vld [vmem:[%s7 + $0x2e0] sm:$0xff]
        %v804 = vld [vmem:[%s7 + $0x2e8] sm:$0xff]
        %v805 = vld [vmem:[%s7 + $0x2f0] sm:$0xff]
        %v806 = vld [vmem:[%s7 + $0x2f8] sm:$0xff]
        %v807 = vld [vmem:[%s7 + $0x300] sm:$0xff]
        %v808 = vld [vmem:[%s7 + $0x308] sm:$0xff]
        %v809 = vld [vmem:[%s7 + $0x310] sm:$0xff]
        %v810 = vld [vmem:[%s7 + $0x318] sm:$0xff]
        %v811 = vld [vmem:[%s7 + $0x320] sm:$0xff]
        %v812 = vld [vmem:[%s7 + $0x328] sm:$0xff]
        %v813 = vld [vmem:[%s7 + $0x330] sm:$0xff]
        %v814 = vld [vmem:[%s7 + $0x338] sm:$0xff]
        %v815 = vld [vmem:[%s7 + $0x340] sm:$0xff]
        %v816 = vld [vmem:[%s7 + $0x348] sm:$0xff]
        %v817 = vld [vmem:[%s7 + $0x350] sm:$0xff]
        %v818 = vld [vmem:[%s7 + $0x358] sm:$0xff]
        %v819 = vld [vmem:[%s7 + $0x360] sm:$0xff]
        %v820 = vld [vmem:[%s7 + $0x368] sm:$0xff]
        %v821 = vld [vmem:[%s7 + $0x370] sm:$0xff]
        %v822 = vld [vmem:[%s7 + $0x378] sm:$0xff]
        %v823 = vld [vmem:[%s7 + $0x380] sm:$0xff]
        %v824 = vld [vmem:[%s7 + $0x388] sm:$0xff]
        %v825 = vld [vmem:[%s7 + $0x390] sm:$0xff]
        %v826 = vld [vmem:[%s7 + $0x398] sm:$0xff]
        %v827 = vld [vmem:[%s7 + $0x3a0] sm:$0xff]
        %v828 = vld [vmem:[%s7 + $0x3a8] sm:$0xff]
        %v829 = vld [vmem:[%s7 + $0x3b0] sm:$0xff]
        %v830 = vld [vmem:[%s7 + $0x3b8] sm:$0xff]
        %v831 = vld [vmem:[%s7 + $0x3c0] sm:$0xff]
        %v832 = vld [vmem:[%s7 + $0x3c8] sm:$0xff]
        %v833 = vld [vmem:[%s7 + $0x3d0] sm:$0xff]
        %v834 = vld [vmem:[%s7 + $0x3d8] sm:$0xff]
        %v835 = vld [vmem:[%s7 + $0x3e0] sm:$0xff]
        %v836 = vld [vmem:[%s7 + $0x3e8] sm:$0xff]
        %v837 = vld [vmem:[%s7 + $0x3f0] sm:$0xff]
        %v838 = vld [vmem:[%s7 + $0x3f8] sm:$0xff]
        %v839 = vld [vmem:[%s7 + $0x400] sm:$0xff]
        %v840 = vld [vmem:[%s7 + $0x408] sm:$0xff]
        %v841 = vld [vmem:[%s7 + $0x410] sm:$0xff]
        %v842 = vld [vmem:[%s7 + $0x418] sm:$0xff]
        %v843 = vld [vmem:[%s7 + $0x420] sm:$0xff]
        %v844 = vld [vmem:[%s7 + $0x428] sm:$0xff]
        %v845 = vld [vmem:[%s7 + $0x430] sm:$0xff]
        %v846 = vld [vmem:[%s7 + $0x438] sm:$0xff]
        %v847 = vld [vmem:[%s7 + $0x440] sm:$0xff]
        %v848 = vld [vmem:[%s7 + $0x448] sm:$0xff]
        %v849 = vld [vmem:[%s7 + $0x450] sm:$0xff]
        %v850 = vld [vmem:[%s7 + $0x458] sm:$0xff]
        %v851 = vld [vmem:[%s7 + $0x460] sm:$0xff]
        %v852 = vld [vmem:[%s7 + $0x468] sm:$0xff]
        %v853 = vld [vmem:[%s7 + $0x470] sm:$0xff]
        %v854 = vld [vmem:[%s7 + $0x478] sm:$0xff]
        %v855 = vld [vmem:[%s7 + $0x480] sm:$0xff]
        %v856 = vld [vmem:[%s7 + $0x488] sm:$0xff]
        %v857 = vld [vmem:[%s7 + $0x490] sm:$0xff]
        %v858 = vld [vmem:[%s7 + $0x498] sm:$0xff]
        %v859 = vld [vmem:[%s7 + $0x4a0] sm:$0xff]
        %v860 = vld [vmem:[%s7 + $0x4a8] sm:$0xff]
        %v861 = vld [vmem:[%s7 + $0x4b0] sm:$0xff]
        %v862 = vld [vmem:[%s7 + $0x4b8] sm:$0xff]
        %v863 = vld [vmem:[%s7 + $0x4c0] sm:$0xff]
        %v864 = vld [vmem:[%s7 + $0x4c8] sm:$0xff]
        %v865 = vld [vmem:[%s7 + $0x4d0] sm:$0xff]
        %v866 = vld [vmem:[%s7 + $0x4d8] sm:$0xff]
        %v867 = vld [vmem:[%s7 + $0x4e0] sm:$0xff]
        %v868 = vld [vmem:[%s7 + $0x4e8] sm:$0xff]
        %v869 = vld [vmem:[%s7 + $0x4f0] sm:$0xff]
        %v870 = vld [vmem:[%s7 + $0x4f8] sm:$0xff]
        %v871 = vld [vmem:[%s7 + $0x500] sm:$0xff]
        %v872 = vld [vmem:[%s7 + $0x508] sm:$0xff]
        %v873 = vld [vmem:[%s7 + $0x510] sm:$0xff]
        %v874 = vld [vmem:[%s7 + $0x518] sm:$0xff]
        %v875 = vld [vmem:[%s7 + $0x520] sm:$0xff]
        %v876 = vld [vmem:[%s7 + $0x528] sm:$0xff]
        %v877 = vld [vmem:[%s7 + $0x530] sm:$0xff]
        %v878 = vld [vmem:[%s7 + $0x538] sm:$0xff]
        %v879 = vld [vmem:[%s7 + $0x540] sm:$0xff]
        %v880 = vld [vmem:[%s7 + $0x548] sm:$0xff]
        %v881 = vld [vmem:[%s7 + $0x550] sm:$0xff]
        %v882 = vld [vmem:[%s7 + $0x558] sm:$0xff]
        %v883 = vld [vmem:[%s7 + $0x560] sm:$0xff]
        %v884 = vld [vmem:[%s7 + $0x568] sm:$0xff]
        %v885 = vld [vmem:[%s7 + $0x570] sm:$0xff]
        %v886 = vld [vmem:[%s7 + $0x578] sm:$0xff]
        %v887 = vld [vmem:[%s7 + $0x580] sm:$0xff]
        %v888 = vld [vmem:[%s7 + $0x588] sm:$0xff]
        %v889 = vld [vmem:[%s7 + $0x590] sm:$0xff]
        %v890 = vld [vmem:[%s7 + $0x598] sm:$0xff]
        %v891 = vld [vmem:[%s7 + $0x5a0] sm:$0xff]
        %v892 = vld [vmem:[%s7 + $0x5a8] sm:$0xff]
        %v893 = vld [vmem:[%s7 + $0x5b0] sm:$0xff]
        %v894 = vld [vmem:[%s7 + $0x5b8] sm:$0xff]
        %v895 = vld [vmem:[%s7 + $0x5c0] sm:$0xff]
        %v896 = vld [vmem:[%s7 + $0x5c8] sm:$0xff]
        %v897 = vld [vmem:[%s7 + $0x5d0] sm:$0xff]
        %v898 = vld [vmem:[%s7 + $0x5d8] sm:$0xff]
        %v899 = vld [vmem:[%s7 + $0x5e0] sm:$0xff]
        %v900 = vld [vmem:[%s7 + $0x5e8] sm:$0xff]
        %v901 = vld [vmem:[%s7 + $0x5f0] sm:$0xff]
        %v902 = vld [vmem:[%s7 + $0x5f8] sm:$0xff]
        %v903 = vld [vmem:[%s8] sm:$0xf]
        %v905 = vlaneseq
        %v906 = vshrl.u32 %v905, 7
        %v907 = vsub.s32 0, %v906
        %v908 = vrot.slane %v903, %v907
        %v909 = vlaneseq
        %v910 = vshrl.u32 %v909, 7
        %v911 = vsub.s32 1, %v910
        %v912 = vrot.slane %v903, %v911
        %v913 = vlaneseq
        %v914 = vshrl.u32 %v913, 7
        %v915 = vsub.s32 2, %v914
        %v916 = vrot.slane %v903, %v915
        %v917 = vlaneseq
        %v918 = vshrl.u32 %v917, 7
        %v919 = vsub.s32 3, %v918
        %v920 = vrot.slane %v903, %v919
        %925 = vmatprep.subr.mxu0 %v772
        %926 = vmatpush1.msra.mxu0 %v771
        %927 = vmatprep.subr.mxu0 %v768
        %928 = vmatpush1.msra.mxu0 %v767
        %929 = vmatprep.subr.mxu0 %v764
        %930 = vmatpush1.msra.mxu0 %v763
        %931 = vmatprep.subr.mxu0 %v760
        %932 = vmatpush1.msra.mxu0 %v759
        %933 = vmatprep.subr.mxu0 %v756
        %934 = vmatpush1.msra.mxu0 %v755
        %935 = vmatprep.subr.mxu0 %v752
        %936 = vmatpush1.msra.mxu0 %v751
        %937 = vmatprep.subr.mxu0 %v748
        %938 = vmatpush1.msra.mxu0 %v747
        %939 = vmatprep.subr.mxu0 %v744
        %940 = vmatpush1.msra.mxu0 %v743
        %941 = vmatprep.subr.mxu0 %v740
        %942 = vmatpush1.msra.mxu0 %v739
        %943 = vmatprep.subr.mxu0 %v736
        %944 = vmatpush1.msra.mxu0 %v735
        %945 = vmatprep.subr.mxu0 %v732
        %946 = vmatpush1.msra.mxu0 %v731
        %947 = vmatprep.subr.mxu0 %v728
        %948 = vmatpush1.msra.mxu0 %v727
        %949 = vmatprep.subr.mxu0 %v724
        %950 = vmatpush1.msra.mxu0 %v723
        %951 = vmatprep.subr.mxu0 %v720
        %952 = vmatpush1.msra.mxu0 %v719
        %953 = vmatprep.subr.mxu0 %v716
        %954 = vmatpush1.msra.mxu0 %v715
        %955 = vmatprep.subr.mxu0 %v712
        %956 = vmatpush1.msra.mxu0 %v711
        %957 = vmatprep.subr.mxu0 %v836
        %958 = vmatpush2.msra.mxu0 %v835
        %959 = vmatprep.subr.mxu0 %v832
        %960 = vmatpush2.msra.mxu0 %v831
        %961 = vmatprep.subr.mxu0 %v828
        %962 = vmatpush2.msra.mxu0 %v827
        %963 = vmatprep.subr.mxu0 %v824
        %964 = vmatpush2.msra.mxu0 %v823
        %965 = vmatprep.subr.mxu0 %v820
        %966 = vmatpush2.msra.mxu0 %v819
        %967 = vmatprep.subr.mxu0 %v816
        %968 = vmatpush2.msra.mxu0 %v815
        %969 = vmatprep.subr.mxu0 %v812
        %970 = vmatpush2.msra.mxu0 %v811
        %971 = vmatprep.subr.mxu0 %v808
        %972 = vmatpush2.msra.mxu0 %v807
        %973 = vmatprep.subr.mxu0 %v804
        %974 = vmatpush2.msra.mxu0 %v803
        %975 = vmatprep.subr.mxu0 %v800
        %976 = vmatpush2.msra.mxu0 %v799
        %977 = vmatprep.subr.mxu0 %v796
        %978 = vmatpush2.msra.mxu0 %v795
        %979 = vmatprep.subr.mxu0 %v792
        %980 = vmatpush2.msra.mxu0 %v791
        %981 = vmatprep.subr.mxu0 %v788
        %982 = vmatpush2.msra.mxu0 %v787
        %983 = vmatprep.subr.mxu0 %v784
        %984 = vmatpush2.msra.mxu0 %v783
        %985 = vmatprep.subr.mxu0 %v780
        %986 = vmatpush2.msra.mxu0 %v779
        %987 = vmatprep.subr.mxu0 %v776
        %988 = vmatpush2.msra.mxu0 %v775
        %989 = vmatprep.mubr.f32.mxu0 %v709
        %990 = vmatmul.mubr.f32.gmra.mxu0 %v706
        %v991 = vpop.f32.mrf.mxu0
        %v992 = vadd.f32 %v908, %v991
        %v993 = vpop.f32.mrf.mxu0
        %v994 = vadd.f32 %v912, %v993
        %995 = vdwg.mxu0
        %996 = vmatprep.subr.mxu0 %v900
        %997 = vmatpush1.msra.mxu0 %v899
        %998 = vmatprep.subr.mxu0 %v896
        %999 = vmatpush1.msra.mxu0 %v895
        %1000 = vmatprep.subr.mxu0 %v892
        %1001 = vmatpush1.msra.mxu0 %v891
        %1002 = vmatprep.subr.mxu0 %v888
        %1003 = vmatpush1.msra.mxu0 %v887
        %1004 = vmatprep.subr.mxu0 %v884
        %1005 = vmatpush1.msra.mxu0 %v883
        %1006 = vmatprep.subr.mxu0 %v880
        %1007 = vmatpush1.msra.mxu0 %v879
        %1008 = vmatprep.subr.mxu0 %v876
        %1009 = vmatpush1.msra.mxu0 %v875
        %1010 = vmatprep.subr.mxu0 %v872
        %1011 = vmatpush1.msra.mxu0 %v871
        %1012 = vmatprep.subr.mxu0 %v868
        %1013 = vmatpush1.msra.mxu0 %v867
        %1014 = vmatprep.subr.mxu0 %v864
        %1015 = vmatpush1.msra.mxu0 %v863
        %1016 = vmatprep.subr.mxu0 %v860
        %1017 = vmatpush1.msra.mxu0 %v859
        %1018 = vmatprep.subr.mxu0 %v856
        %1019 = vmatpush1.msra.mxu0 %v855
        %1020 = vmatprep.subr.mxu0 %v852
        %1021 = vmatpush1.msra.mxu0 %v851
        %1022 = vmatprep.subr.mxu0 %v848
        %1023 = vmatpush1.msra.mxu0 %v847
        %1024 = vmatprep.subr.mxu0 %v844
        %1025 = vmatpush1.msra.mxu0 %v843
        %1026 = vmatprep.subr.mxu0 %v840
        %1027 = vmatpush1.msra.mxu0 %v839
        %1028 = vmatprep.subr.mxu0 0.0
        %1029 = vmatpush2.msra.mxu0 0.0
        %1030 = vmatprep.subr.mxu0 0.0
        %1031 = vmatpush2.msra.mxu0 0.0
        %1032 = vmatprep.subr.mxu0 0.0
        %1033 = vmatpush2.msra.mxu0 0.0
        %1034 = vmatprep.subr.mxu0 0.0
        %1035 = vmatpush2.msra.mxu0 0.0
        %1036 = vmatprep.subr.mxu0 0.0
        %1037 = vmatpush2.msra.mxu0 0.0
        %1038 = vmatprep.subr.mxu0 0.0
        %1039 = vmatpush2.msra.mxu0 0.0
        %1040 = vmatprep.subr.mxu0 0.0
        %1041 = vmatpush2.msra.mxu0 0.0
        %1042 = vmatprep.subr.mxu0 0.0
        %1043 = vmatpush2.msra.mxu0 0.0
        %1044 = vmatprep.subr.mxu0 0.0
        %1045 = vmatpush2.msra.mxu0 0.0
        %1046 = vmatprep.subr.mxu0 0.0
        %1047 = vmatpush2.msra.mxu0 0.0
        %1048 = vmatprep.subr.mxu0 0.0
        %1049 = vmatpush2.msra.mxu0 0.0
        %1050 = vmatprep.subr.mxu0 0.0
        %1051 = vmatpush2.msra.mxu0 0.0
        %1052 = vmatprep.subr.mxu0 0.0
        %1053 = vmatpush2.msra.mxu0 0.0
        %1054 = vmatprep.subr.mxu0 0.0
        %1055 = vmatpush2.msra.mxu0 0.0
        %1056 = vmatprep.subr.mxu0 0.0
        %1057 = vmatpush2.msra.mxu0 0.0
        %1058 = vmatprep.subr.mxu0 0.0
        %1059 = vmatpush2.msra.mxu0 0.0
        %1060 = vmatprep.mubr.f32.mxu0 0.0
        %1061 = vmatmul.mubr.f32.gmra.mxu0 %v458
        %v1062 = vpop.f32.mrf.mxu0
        %v1063 = vadd.f32 %v992, %v1062
        %v1064 = vpop.f32.mrf.mxu0
        %v1065 = vadd.f32 %v994, %v1064
        %1066 = vdwg.mxu0
        %1067 = vmatprep.subr.mxu0 %v774
        %1068 = vmatpush1.msra.mxu0 %v773
        %1069 = vmatprep.subr.mxu0 %v770
        %1070 = vmatpush1.msra.mxu0 %v769
        %1071 = vmatprep.subr.mxu0 %v766
        %1072 = vmatpush1.msra.mxu0 %v765
        %1073 = vmatprep.subr.mxu0 %v762
        %1074 = vmatpush1.msra.mxu0 %v761
        %1075 = vmatprep.subr.mxu0 %v758
        %1076 = vmatpush1.msra.mxu0 %v757
        %1077 = vmatprep.subr.mxu0 %v754
        %1078 = vmatpush1.msra.mxu0 %v753
        %1079 = vmatprep.subr.mxu0 %v750
        %1080 = vmatpush1.msra.mxu0 %v749
        %1081 = vmatprep.subr.mxu0 %v746
        %1082 = vmatpush1.msra.mxu0 %v745
        %1083 = vmatprep.subr.mxu0 %v742
        %1084 = vmatpush1.msra.mxu0 %v741
        %1085 = vmatprep.subr.mxu0 %v738
        %1086 = vmatpush1.msra.mxu0 %v737
        %1087 = vmatprep.subr.mxu0 %v734
        %1088 = vmatpush1.msra.mxu0 %v733
        %1089 = vmatprep.subr.mxu0 %v730
        %1090 = vmatpush1.msra.mxu0 %v729
        %1091 = vmatprep.subr.mxu0 %v726
        %1092 = vmatpush1.msra.mxu0 %v725
        %1093 = vmatprep.subr.mxu0 %v722
        %1094 = vmatpush1.msra.mxu0 %v721
        %1095 = vmatprep.subr.mxu0 %v718
        %1096 = vmatpush1.msra.mxu0 %v717
        %1097 = vmatprep.subr.mxu0 %v714
        %1098 = vmatpush1.msra.mxu0 %v713
        %1099 = vmatprep.subr.mxu0 %v838
        %1100 = vmatpush2.msra.mxu0 %v837
        %1101 = vmatprep.subr.mxu0 %v834
        %1102 = vmatpush2.msra.mxu0 %v833
        %1103 = vmatprep.subr.mxu0 %v830
        %1104 = vmatpush2.msra.mxu0 %v829
        %1105 = vmatprep.subr.mxu0 %v826
        %1106 = vmatpush2.msra.mxu0 %v825
        %1107 = vmatprep.subr.mxu0 %v822
        %1108 = vmatpush2.msra.mxu0 %v821
        %1109 = vmatprep.subr.mxu0 %v818
        %1110 = vmatpush2.msra.mxu0 %v817
        %1111 = vmatprep.subr.mxu0 %v814
        %1112 = vmatpush2.msra.mxu0 %v813
        %1113 = vmatprep.subr.mxu0 %v810
        %1114 = vmatpush2.msra.mxu0 %v809
        %1115 = vmatprep.subr.mxu0 %v806
        %1116 = vmatpush2.msra.mxu0 %v805
        %1117 = vmatprep.subr.mxu0 %v802
        %1118 = vmatpush2.msra.mxu0 %v801
        %1119 = vmatprep.subr.mxu0 %v798
        %1120 = vmatpush2.msra.mxu0 %v797
        %1121 = vmatprep.subr.mxu0 %v794
        %1122 = vmatpush2.msra.mxu0 %v793
        %1123 = vmatprep.subr.mxu0 %v790
        %1124 = vmatpush2.msra.mxu0 %v789
        %1125 = vmatprep.subr.mxu0 %v786
        %1126 = vmatpush2.msra.mxu0 %v785
        %1127 = vmatprep.subr.mxu0 %v782
        %1128 = vmatpush2.msra.mxu0 %v781
        %1129 = vmatprep.subr.mxu0 %v778
        %1130 = vmatpush2.msra.mxu0 %v777
        %1131 = vmatprep.mubr.f32.mxu0 %v709
        %1132 = vmatmul.mubr.f32.gmra.mxu0 %v706
        %v1133 = vpop.f32.mrf.mxu0
        %v1134 = vadd.f32 %v916, %v1133
        %v1135 = vpop.f32.mrf.mxu0
        %v1136 = vadd.f32 %v920, %v1135
        %1137 = vdwg.mxu0
        %1138 = vmatprep.subr.mxu0 %v902
        %1139 = vmatpush1.msra.mxu0 %v901
        %1140 = vmatprep.subr.mxu0 %v898
        %1141 = vmatpush1.msra.mxu0 %v897
        %1142 = vmatprep.subr.mxu0 %v894
        %1143 = vmatpush1.msra.mxu0 %v893
        %1144 = vmatprep.subr.mxu0 %v890
        %1145 = vmatpush1.msra.mxu0 %v889
        %1146 = vmatprep.subr.mxu0 %v886
        %1147 = vmatpush1.msra.mxu0 %v885
        %1148 = vmatprep.subr.mxu0 %v882
        %1149 = vmatpush1.msra.mxu0 %v881
        %1150 = vmatprep.subr.mxu0 %v878
        %1151 = vmatpush1.msra.mxu0 %v877
        %1152 = vmatprep.subr.mxu0 %v874
        %1153 = vmatpush1.msra.mxu0 %v873
        %1154 = vmatprep.subr.mxu0 %v870
        %1155 = vmatpush1.msra.mxu0 %v869
        %1156 = vmatprep.subr.mxu0 %v866
        %1157 = vmatpush1.msra.mxu0 %v865
        %1158 = vmatprep.subr.mxu0 %v862
        %1159 = vmatpush1.msra.mxu0 %v861
        %1160 = vmatprep.subr.mxu0 %v858
        %1161 = vmatpush1.msra.mxu0 %v857
        %1162 = vmatprep.subr.mxu0 %v854
        %1163 = vmatpush1.msra.mxu0 %v853
        %1164 = vmatprep.subr.mxu0 %v850
        %1165 = vmatpush1.msra.mxu0 %v849
        %1166 = vmatprep.subr.mxu0 %v846
        %1167 = vmatpush1.msra.mxu0 %v845
        %1168 = vmatprep.subr.mxu0 %v842
        %1169 = vmatpush1.msra.mxu0 %v841
        %1170 = vmatprep.subr.mxu0 0.0
        %1171 = vmatpush2.msra.mxu0 0.0
        %1172 = vmatprep.subr.mxu0 0.0
        %1173 = vmatpush2.msra.mxu0 0.0
        %1174 = vmatprep.subr.mxu0 0.0
        %1175 = vmatpush2.msra.mxu0 0.0
        %1176 = vmatprep.subr.mxu0 0.0
        %1177 = vmatpush2.msra.mxu0 0.0
        %1178 = vmatprep.subr.mxu0 0.0
        %1179 = vmatpush2.msra.mxu0 0.0
        %1180 = vmatprep.subr.mxu0 0.0
        %1181 = vmatpush2.msra.mxu0 0.0
        %1182 = vmatprep.subr.mxu0 0.0
        %1183 = vmatpush2.msra.mxu0 0.0
        %1184 = vmatprep.subr.mxu0 0.0
        %1185 = vmatpush2.msra.mxu0 0.0
        %1186 = vmatprep.subr.mxu0 0.0
        %1187 = vmatpush2.msra.mxu0 0.0
        %1188 = vmatprep.subr.mxu0 0.0
        %1189 = vmatpush2.msra.mxu0 0.0
        %1190 = vmatprep.subr.mxu0 0.0
        %1191 = vmatpush2.msra.mxu0 0.0
        %1192 = vmatprep.subr.mxu0 0.0
        %1193 = vmatpush2.msra.mxu0 0.0
        %1194 = vmatprep.subr.mxu0 0.0
        %1195 = vmatpush2.msra.mxu0 0.0
        %1196 = vmatprep.subr.mxu0 0.0
        %1197 = vmatpush2.msra.mxu0 0.0
        %1198 = vmatprep.subr.mxu0 0.0
        %1199 = vmatpush2.msra.mxu0 0.0
        %1200 = vmatprep.subr.mxu0 0.0
        %1201 = vmatpush2.msra.mxu0 0.0
        %1202 = vmatprep.mubr.f32.mxu0 0.0
        %1203 = vmatmul.mubr.f32.gmra.mxu0 %v458
        %v1204 = vpop.f32.mrf.mxu0
        %v1205 = vadd.f32 %v1134, %v1204
        %v1206 = vpop.f32.mrf.mxu0
        %v1207 = vadd.f32 %v1136, %v1206
        %1208 = vdwg.mxu0
        %v1209 = vxor.u32 %v1063, 2147483648
        %v1210 = vmul.f32 %v1209, 1.442695
        %v1211 = vpow.pop %v1210
        %v1212 = vadd.f32 %v1211, 1.0
        %v1213 = vrcp.pop %v1212
        %v1214 = vmul.f32 1.0, %v1213
        %v1215 = vxor.u32 %v1065, 2147483648
        %v1216 = vmul.f32 %v1215, 1.442695
        %v1217 = vpow.pop %v1216
        %v1218 = vadd.f32 %v1217, 1.0
        %v1219 = vrcp.pop %v1218
        %v1220 = vmul.f32 1.0, %v1219
        %v1221 = vtanh.pop %v1205
        %v1222 = vxor.u32 %v1207, 2147483648
        %v1223 = vmul.f32 %v1222, 1.442695
        %v1224 = vpow.pop %v1223
        %v1225 = vadd.f32 %v1224, 1.0
        %v1226 = vrcp.pop %v1225
        %v1227 = vmul.f32 1.0, %v1226
        %v1228 = vld [vmem:[#allocation3] sm:$0x3]
        %v1229 = vmul.f32 %v1220, %v1228
        %v1230 = vmul.f32 %v1214, %v1221
        %v1231 = vadd.f32 %v1229, %v1230
        %v1232 = vtanh.pop %v1231
        %v1233 = vmul.f32 %v1227, %v1232
        %1234 = vst [vmem:[#allocation2] sm:$0x3] %v1233
        %1235 = vst [vmem:[#allocation3] sm:$0x3] %v1231
        %v1236 = vld [vmem:[#allocation6] sm:$0xff]
        %v1237 = vld [vmem:[#allocation6 + $0x8] sm:$0xff]
        %v1238 = vld [vmem:[#allocation6 + $0x10] sm:$0xff]
        %v1239 = vld [vmem:[#allocation6 + $0x18] sm:$0xff]
        %v1240 = vld [vmem:[#allocation6 + $0x20] sm:$0xff]
        %v1241 = vld [vmem:[#allocation6 + $0x28] sm:$0xff]
        %v1242 = vld [vmem:[#allocation6 + $0x30] sm:$0xff]
        %v1243 = vld [vmem:[#allocation6 + $0x38] sm:$0xff]
        %v1244 = vld [vmem:[#allocation6 + $0x40] sm:$0xff]
        %v1245 = vld [vmem:[#allocation6 + $0x48] sm:$0xff]
        %v1246 = vld [vmem:[#allocation6 + $0x50] sm:$0xff]
        %v1247 = vld [vmem:[#allocation6 + $0x58] sm:$0xff]
        %v1248 = vld [vmem:[#allocation6 + $0x60] sm:$0xff]
        %v1249 = vld [vmem:[#allocation6 + $0x68] sm:$0xff]
        %v1250 = vld [vmem:[#allocation6 + $0x70] sm:$0xff]
        %v1251 = vld [vmem:[#allocation6 + $0x78] sm:$0xff]
        %v1252 = vld [vmem:[%s10] sm:$0x1]
        %v1254 = vlaneseq
        %v1255 = vshrl.u32 %v1254, 7
        %v1256 = vsub.s32 0, %v1255
        %v1257 = vrot.slane %v1252, %v1256
        %1259 = vmatprep.subr.mxu0 0.0
        %1260 = vmatpush1.msra.mxu0 %v1251
        %1261 = vmatprep.subr.mxu0 0.0
        %1262 = vmatpush1.msra.mxu0 %v1250
        %1263 = vmatprep.subr.mxu0 0.0
        %1264 = vmatpush1.msra.mxu0 %v1249
        %1265 = vmatprep.subr.mxu0 0.0
        %1266 = vmatpush1.msra.mxu0 %v1248
        %1267 = vmatprep.subr.mxu0 0.0
        %1268 = vmatpush1.msra.mxu0 %v1247
        %1269 = vmatprep.subr.mxu0 0.0
        %1270 = vmatpush1.msra.mxu0 %v1246
        %1271 = vmatprep.subr.mxu0 0.0
        %1272 = vmatpush1.msra.mxu0 %v1245
        %1273 = vmatprep.subr.mxu0 0.0
        %1274 = vmatpush1.msra.mxu0 %v1244
        %1275 = vmatprep.subr.mxu0 0.0
        %1276 = vmatpush1.msra.mxu0 %v1243
        %1277 = vmatprep.subr.mxu0 0.0
        %1278 = vmatpush1.msra.mxu0 %v1242
        %1279 = vmatprep.subr.mxu0 0.0
        %1280 = vmatpush1.msra.mxu0 %v1241
        %1281 = vmatprep.subr.mxu0 0.0
        %1282 = vmatpush1.msra.mxu0 %v1240
        %1283 = vmatprep.subr.mxu0 0.0
        %1284 = vmatpush1.msra.mxu0 %v1239
        %1285 = vmatprep.subr.mxu0 0.0
        %1286 = vmatpush1.msra.mxu0 %v1238
        %1287 = vmatprep.subr.mxu0 0.0
        %1288 = vmatpush1.msra.mxu0 %v1237
        %1289 = vmatprep.subr.mxu0 0.0
        %1290 = vmatpush1.msra.mxu0 %v1236
        %1291 = vmatprep.subr.mxu0 0.0
        %1292 = vmatpush2.msra.mxu0 0.0
        %1293 = vmatprep.subr.mxu0 0.0
        %1294 = vmatpush2.msra.mxu0 0.0
        %1295 = vmatprep.subr.mxu0 0.0
        %1296 = vmatpush2.msra.mxu0 0.0
        %1297 = vmatprep.subr.mxu0 0.0
        %1298 = vmatpush2.msra.mxu0 0.0
        %1299 = vmatprep.subr.mxu0 0.0
        %1300 = vmatpush2.msra.mxu0 0.0
        %1301 = vmatprep.subr.mxu0 0.0
        %1302 = vmatpush2.msra.mxu0 0.0
        %1303 = vmatprep.subr.mxu0 0.0
        %1304 = vmatpush2.msra.mxu0 0.0
        %1305 = vmatprep.subr.mxu0 0.0
        %1306 = vmatpush2.msra.mxu0 0.0
        %1307 = vmatprep.subr.mxu0 0.0
        %1308 = vmatpush2.msra.mxu0 0.0
        %1309 = vmatprep.subr.mxu0 0.0
        %1310 = vmatpush2.msra.mxu0 0.0
        %1311 = vmatprep.subr.mxu0 0.0
        %1312 = vmatpush2.msra.mxu0 0.0
        %1313 = vmatprep.subr.mxu0 0.0
        %1314 = vmatpush2.msra.mxu0 0.0
        %1315 = vmatprep.subr.mxu0 0.0
        %1316 = vmatpush2.msra.mxu0 0.0
        %1317 = vmatprep.subr.mxu0 0.0
        %1318 = vmatpush2.msra.mxu0 0.0
        %1319 = vmatprep.subr.mxu0 0.0
        %1320 = vmatpush2.msra.mxu0 0.0
        %1321 = vmatprep.subr.mxu0 0.0
        %1322 = vmatpush2.msra.mxu0 0.0
        %1323 = vmatprep.mubr.f32.mxu0 0.0
        %1324 = vmatmul.mubr.f32.gmra.mxu0 %v1233
        %v1325 = vpop.f32.mrf.mxu0
        %v1326 = vadd.f32 %v1257, %v1325
        %v1327 = vpop.f32.mrf.mxu0
        %1328 = vdwg.mxu0
        %1329 = vst [vmem:[%s445] sm:$0x3] %v1326
        %p1330 = scmp.lt.s32.totalorder %s26, 6
        %s1331 = scalar_select %p1330, %s26, 6
        %s1332 = smul.addr %s1331, 2
        %s1333 = scalar_lea.vmem %s11, %s1332
        %p1334 = scmp.lt.s32.totalorder %s26, 6
        %s1335 = scalar_select %p1334, %s26, 6
        %s1336 = smul.addr %s1335, 2
        %s1337 = scalar_lea.vmem %s12, %s1336
        // Predicated region
        $region77: #{transliteration_forward.3} parent=63 // pred_check
          %p1338 = pneg %p280
        $region78: #{transliteration_forward.3} parent=63 // pred_check_branch
          %1340 = sbr.rel (%p1338) target = $region80
        $region79: #{transliteration_forward.3} parent=63 // pred_region
          _
        $region80: #{transliteration_forward.3} parent=63 // pred_fallthru
          _
        // Predicated region
        $region81: #{transliteration_forward.3} parent=63 // pred_check
          %p1341 = pneg %p306
        $region82: #{transliteration_forward.3} parent=63 // pred_check_branch
          %1343 = sbr.rel (%p1341) target = $region84
        $region83: #{transliteration_forward.3} parent=63 // pred_region
          _
        $region84: #{transliteration_forward.3} parent=63 // pred_fallthru
          _
      $region64: #{transliteration_forward.3} parent=5 // pred_fallthru
        _
      %p1344 = scmp.le.s32.totalorder 2, %s21
      // Predicated region
      $region85: #{transliteration_forward.3} parent=5 // pred_check
        %p1345 = pneg %p1344
      $region86: #{transliteration_forward.3} parent=5 // pred_check_branch
        %1347 = sbr.rel (%p1345) target = $region88
      $region87: #{transliteration_forward.3} parent=5 // pred_region
        %s1348 = ssub.s32 %s21, 2
        // Predicated region
        $region89: #{transliteration_forward.3} parent=87 // pred_check
          %p1349 = pneg %p286
        $region90: #{transliteration_forward.3} parent=87 // pred_check_branch
          %1351 = sbr.rel (%p1349) target = $region92
        $region91: #{transliteration_forward.3} parent=87 // pred_region
          %p1352 = scmp.lt.s32.totalorder %s27, 6
          %s1353 = scalar_select %p1352, %s27, 6
          %s1354 = smul.addr %s1353, 2
          %s1355 = scalar_lea.vmem %s11, %s1354
        $region92: #{transliteration_forward.3} parent=87 // pred_fallthru
          _
        // Predicated region
        $region93: #{transliteration_forward.3} parent=87 // pred_check
          %p1356 = pneg %p312
        $region94: #{transliteration_forward.3} parent=87 // pred_check_branch
          %1358 = sbr.rel (%p1356) target = $region96
        $region95: #{transliteration_forward.3} parent=87 // pred_region
          %p1359 = scmp.lt.s32.totalorder %s27, 6
          %s1360 = scalar_select %p1359, %s27, 6
          %s1361 = smul.addr %s1360, 2
          %s1362 = scalar_lea.vmem %s12, %s1361
        $region96: #{transliteration_forward.3} parent=87 // pred_fallthru
          _
      $region88: #{transliteration_forward.3} parent=5 // pred_fallthru
        _
    $region6: #{transliteration_forward.3} parent=1 // loop_footer
      %s25 = sadd.s32 1, %s21
    $region7: #{transliteration_forward.3} parent=1 // loop_footer_branch
      %20 = sbr.rel target = $region3
    $region8: #{transliteration_forward.3} parent=1 // loop_exit
      _
    %1363 = vsyncpa [#allocation5], 1
    %s1364 = scalar_lea.sflag [#allocation5], 1
    %1365 = vsyncpa %s1364, 1
    %1366 = vsyncpa [#allocation7], 1

</llo_original>
